<compile_context>
chip_gen: v7x
topology: tpu7x:2x2x1
jax: 0.10.0
libtpu: 0.0.40
codegen_flags: <defaults>
</compile_context>

<pallas_src>
import functools
import math

import jax
import jax.numpy as jnp
from jax import lax
from jax.experimental import pallas as pl
from jax.experimental.pallas import tpu as pltpu

# ----------------------------- model config ---------------------------------
VOCAB = 256
D_MODEL = 128
N_HEADS = 4
HEAD_DIM = D_MODEL // N_HEADS      # 32
HALF = HEAD_DIM // 2               # 16
D_FF = 256
N_LAYERS = 2
EPS = 1e-6
ROPE_THETA = 10000.0


# ------------------------------ kernel helpers -------------------------------
def _rms(x, w):
    # x: [M, D] f32, w: [1, D] f32
    var = jnp.mean(x * x, axis=-1, keepdims=True)
    return x * lax.rsqrt(var + EPS) * w


def _make_fused_forward(B, S, collect):
    """Whole-model fused pallas_call for a fixed (B, S); batch folded into M."""
    M = B * S
    scale = 1.0 / math.sqrt(HEAD_DIM)
    last_layer = N_LAYERS - 1

    def kernel(h0_ref, cos_ref, sin_ref, mask_ref,
               ln_attn_ref, ln_mlp_ref,
               wqkv_ref, wo_ref, wgu_ref, wdown_ref,
               ln_f_ref, lm_head_ref,
               *outs_and_scratch):
        if collect:
            logits_ref, probs_ref, attn_out_ref, h_scr = outs_and_scratch
        else:
            logits_ref, h_scr = outs_and_scratch
            probs_ref = None
            attn_out_ref = None

        layer = pl.program_id(0)

        @pl.when(layer == 0)
        def _():
            h_scr[...] = h0_ref[...]          # init residual stream

        h = h_scr[...]                        # [M, D] f32
        cos = cos_ref[...]                    # [M, D] f32 (per-head tiled)
        sin = sin_ref[...]
        mask = mask_ref[...]                  # [M, M] f32 additive bias

        # ------------------------- attention block ---------------------------
        x = _rms(h, ln_attn_ref[...])
        qkv = jnp.dot(x.astype(jnp.bfloat16), wqkv_ref[...],
                      preferred_element_type=jnp.float32)        # [M, 5D]
        q = qkv[:, 0:D_MODEL]
        q_rot = qkv[:, D_MODEL:2 * D_MODEL]          # rotate_half(q) via weights
        k = qkv[:, 2 * D_MODEL:3 * D_MODEL]
        k_rot = qkv[:, 3 * D_MODEL:4 * D_MODEL]
        v = qkv[:, 4 * D_MODEL:5 * D_MODEL]

        # Lane-dense RoPE: two full-width FMAs (identical to rotate_half RoPE).
        q_roped = (q * cos + q_rot * sin).astype(jnp.bfloat16)
        k_roped = (k * cos + k_rot * sin).astype(jnp.bfloat16)
        v_bf = v.astype(jnp.bfloat16)

        attn_out = jnp.zeros((M, D_MODEL), jnp.float32)
        for hh in range(N_HEADS):
            c0 = hh * HEAD_DIM
            qh = q_roped[:, c0:c0 + HEAD_DIM]
            kh = k_roped[:, c0:c0 + HEAD_DIM]
            vh = v_bf[:, c0:c0 + HEAD_DIM]

            # q @ k^T via dot_general contracting last dims (no k.T relayout).
            s = lax.dot_general(qh, kh, (((1,), (1,)), ((), ())),
                                preferred_element_type=jnp.float32)
            s = s * scale + mask                              # block-causal mask
            m = jnp.max(s, axis=-1, keepdims=True)
            e = jnp.exp(s - m)
            p = e / jnp.sum(e, axis=-1, keepdims=True)        # exact softmax
            if probs_ref is not None:
                probs_ref[hh] = p                             # [M, M]

            ctx = jnp.dot(p.astype(jnp.bfloat16), vh,
                          preferred_element_type=jnp.float32)  # [M, 32]
            # concat(ctx over heads) @ wo == sum_h ctx_h @ wo[h*32:(h+1)*32]
            attn_out = attn_out + jnp.dot(
                ctx.astype(jnp.bfloat16), wo_ref[c0:c0 + HEAD_DIM, :],
                preferred_element_type=jnp.float32)

        if attn_out_ref is not None:
            attn_out_ref[...] = attn_out                      # lane-dense [M, 128]
        h = h + attn_out

        # ---------------------------- MLP block -------------------------------
        xm = _rms(h, ln_mlp_ref[...])
        gu = jnp.dot(xm.astype(jnp.bfloat16), wgu_ref[...],
                     preferred_element_type=jnp.float32)      # [M, 2F]
        g = gu[:, :D_FF]
        u = gu[:, D_FF:]
        mlp = jnp.dot(((g * jax.nn.sigmoid(g)) * u).astype(jnp.bfloat16),
                      wdown_ref[...], preferred_element_type=jnp.float32)
        h = h + mlp
        h_scr[...] = h

        # --------------------- final norm + LM head ---------------------------
        @pl.when(layer == last_layer)
        def _():
            xf = _rms(h, ln_f_ref[...])
            logits_ref[...] = jnp.dot(xf.astype(jnp.bfloat16), lm_head_ref[...],
                                      preferred_element_type=jnp.float32)

    cmap2 = lambda l: (0, 0)             # shared (per-forward) constants
    wmap3 = lambda l: (l, 0, 0)          # per-layer stacked weights

    in_specs = [
        pl.BlockSpec((M, D_MODEL), cmap2),                            # h0
        pl.BlockSpec((M, D_MODEL), cmap2),                            # cos
        pl.BlockSpec((M, D_MODEL), cmap2),                            # sin
        pl.BlockSpec((M, M), cmap2),                                  # mask bias
        pl.BlockSpec((pl.Squeezed(), 1, D_MODEL), wmap3),             # ln_attn
        pl.BlockSpec((pl.Squeezed(), 1, D_MODEL), wmap3),             # ln_mlp
        pl.BlockSpec((pl.Squeezed(), D_MODEL, 5 * D_MODEL), wmap3),   # wqkv (+rot)
        pl.BlockSpec((pl.Squeezed(), D_MODEL, D_MODEL), wmap3),       # wo
        pl.BlockSpec((pl.Squeezed(), D_MODEL, 2 * D_FF), wmap3),      # w_gate_up
        pl.BlockSpec((pl.Squeezed(), D_FF, D_MODEL), wmap3),          # w_down
        pl.BlockSpec((1, D_MODEL), cmap2),                            # ln_f
        pl.BlockSpec((D_MODEL, VOCAB), cmap2),                        # lm_head
    ]

    if collect:
        out_shape = (
            jax.ShapeDtypeStruct((M, VOCAB), jnp.float32),                  # logits
            jax.ShapeDtypeStruct((N_LAYERS, N_HEADS, M, M), jnp.float32),   # probs
            jax.ShapeDtypeStruct((N_LAYERS, M, D_MODEL), jnp.float32),      # attn out
        )
        out_specs = (
            pl.BlockSpec((M, VOCAB), cmap2),
            pl.BlockSpec((pl.Squeezed(), N_HEADS, M, M), lambda l: (l, 0, 0, 0)),
            pl.BlockSpec((pl.Squeezed(), M, D_MODEL), wmap3),
        )
    else:
        out_shape = jax.ShapeDtypeStruct((M, VOCAB), jnp.float32)
        out_specs = pl.BlockSpec((M, VOCAB), cmap2)

    return pl.pallas_call(
        kernel,
        out_shape=out_shape,
        grid=(N_LAYERS,),
        in_specs=in_specs,
        out_specs=out_specs,
        scratch_shapes=[pltpu.VMEM((M, D_MODEL), jnp.float32)],   # residual carry
        compiler_params=pltpu.CompilerParams(
            dimension_semantics=("arbitrary",)),
    )


# ------------------------------- JAX glue ------------------------------------
def rope_tables(B, S):
    """Full-width cos/sin tables, per-head tiled and batch-folded: [B*S, D]."""
    inv_freq = 1.0 / (ROPE_THETA ** (jnp.arange(0, HEAD_DIM, 2, dtype=jnp.float32)
                                     / HEAD_DIM))
    freqs = jnp.outer(jnp.arange(S, dtype=jnp.float32), inv_freq)     # [S, HALF]
    cos = jnp.concatenate([jnp.cos(freqs), jnp.cos(freqs)], axis=-1)  # [S, 32]
    sin = jnp.concatenate([jnp.sin(freqs), jnp.sin(freqs)], axis=-1)
    cosD = jnp.tile(cos, (1, N_HEADS))                                # [S, 128]
    sinD = jnp.tile(sin, (1, N_HEADS))
    return jnp.tile(cosD, (B, 1)), jnp.tile(sinD, (B, 1))             # [B*S, 128]


def causal_block_mask(B, S):
    """Block-diagonal causal additive bias for batch folded into M."""
    M = B * S
    row = jnp.arange(M)[:, None]
    col = jnp.arange(M)[None, :]
    ok = (row // S == col // S) & (col <= row)
    return jnp.where(ok, 0.0, -1e30).astype(jnp.float32)


def init_params(key):
    def dense(k, shape):
        return jax.random.normal(k, shape, jnp.float32) * 0.02

    keys = jax.random.split(key, 2 + N_LAYERS)
    params = {
        "embed": dense(keys[0], (VOCAB, D_MODEL)),
        "lm_head": dense(keys[1], (D_MODEL, VOCAB)),
        "ln_f": jnp.ones((D_MODEL,), jnp.float32),
        "layers": [],
    }
    for i in range(N_LAYERS):
        lk = jax.random.split(keys[2 + i], 7)
        params["layers"].append({
            "wq": dense(lk[0], (D_MODEL, D_MODEL)),
            "wk": dense(lk[1], (D_MODEL, D_MODEL)),
            "wv": dense(lk[2], (D_MODEL, D_MODEL)),
            "wo": dense(lk[3], (D_MODEL, D_MODEL)),
            "w_gate": dense(lk[4], (D_MODEL, D_FF)),
            "w_up": dense(lk[5], (D_MODEL, D_FF)),
            "w_down": dense(lk[6], (D_FF, D_MODEL)),
            "ln_attn": jnp.ones((D_MODEL,), jnp.float32),
            "ln_mlp": jnp.ones((D_MODEL,), jnp.float32),
        })
    return params


def _rotate_half_cols(w):
    """Column-permute/negate so that x @ W_rot == rotate_half(x @ W) per head."""
    parts = []
    for h in range(N_HEADS):
        c0 = h * HEAD_DIM
        first = w[:, c0:c0 + HALF]
        second = w[:, c0 + HALF:c0 + HEAD_DIM]
        parts.append(jnp.concatenate([-second, first], axis=1))
    return jnp.concatenate(parts, axis=1)


def pack_params(params):
    """Stack per-layer weights along a leading layer axis; fuse Q/Qrot/K/Krot/V
    and gate/up; matmul weights bf16 (MXU-native), norm weights f32."""
    ls = params["layers"]
    wqkv = jnp.stack([
        jnp.concatenate([l["wq"], _rotate_half_cols(l["wq"]),
                         l["wk"], _rotate_half_cols(l["wk"]),
                         l["wv"]], axis=1)
        for l in ls]).astype(jnp.bfloat16)
    return {
        "embed": params["embed"],
        "lm_head": params["lm_head"].astype(jnp.bfloat16),
        "ln_f": params["ln_f"].reshape(1, D_MODEL),
        "ln_attn": jnp.stack([l["ln_attn"].reshape(1, D_MODEL) for l in ls]),
        "ln_mlp": jnp.stack([l["ln_mlp"].reshape(1, D_MODEL) for l in ls]),
        "wqkv": wqkv,
        "wo": jnp.stack([l["wo"] for l in ls]).astype(jnp.bfloat16),
        "wgu": jnp.stack([jnp.concatenate([l["w_gate"], l["w_up"]], axis=1)
                          for l in ls]).astype(jnp.bfloat16),
        "wdown": jnp.stack([l["w_down"] for l in ls]).astype(jnp.bfloat16),
    }


@functools.partial(jax.jit, static_argnames=("collect",))
def llama_forward(packed, tokens, collect=True):
    B, S = tokens.shape
    M = B * S
    h0 = packed["embed"][tokens].reshape(M, D_MODEL)      # embedding gather (glue)
    cosM, sinM = rope_tables(B, S)
    mask = causal_block_mask(B, S)

    fwd = _make_fused_forward(B, S, collect)
    args = (h0, cosM, sinM, mask,
            packed["ln_attn"], packed["ln_mlp"],
            packed["wqkv"], packed["wo"], packed["wgu"], packed["wdown"],
            packed["ln_f"], packed["lm_head"])

    if collect:
        logits, probs, attn_out = fwd(*args)
        # probs were computed on the folded [M, M] score matrix; extract the
        # per-batch diagonal [S, S] blocks (off-diagonal blocks are masked ~0).
        pr = probs.reshape(N_LAYERS, N_HEADS, B, S, B, S)
        probs_b = jnp.moveaxis(jnp.diagonal(pr, axis1=2, axis2=4), -1, 0)  # [B,L,H,S,S]
        attn_b = jnp.transpose(attn_out.reshape(N_LAYERS, B, S, D_MODEL),
                               (1, 0, 2, 3))                               # [B,L,S,D]
        return logits.reshape(B, S, VOCAB), probs_b, attn_b

    logits = fwd(*args)
    return logits.reshape(B, S, VOCAB), None, None


class AnnotatedLlamaPallas:
    """Mirrors Annotated_Llama: forward returns (model_output, {layer: int_values})."""

    def __init__(self, params, layers=None):
        self.params = params
        self.packed = pack_params(params)
        self.layers_to_collect = layers
        self.collect = {i: True for i in range(N_LAYERS)}

    def toggle_layer(self, layer_to_annotate):
        for i in range(N_LAYERS):
            if self.layers_to_collect is not None and i not in self.layers_to_collect:
                continue
            self.collect[i] = (i == layer_to_annotate)

    def _active_layers(self):
        out = []
        for i in range(N_LAYERS):
            if self.layers_to_collect is not None and i not in self.layers_to_collect:
                continue
            if self.collect.get(i, True):
                out.append(i)
        return out

    def __call__(self, tokens):
        active = self._active_layers()
        need_annotations = len(active) > 0
        logits, probs, attn_out = llama_forward(self.packed, tokens,
                                                collect=need_annotations)
        int_values = {}
        if need_annotations:
            for i in active:
                int_values[i] = {
                    "attn_probs": probs[:, i],       # [B, H, S, S]
                    "attn_output": attn_out[:, i],   # [B, S, D]
                }
        return logits, int_values


# --------------------------------- main --------------------------------------
if __name__ == "__main__":
    key = jax.random.PRNGKey(0)
    k_params, k_tok = jax.random.split(key)

    params = init_params(k_params)
    tokens = jax.random.randint(k_tok, (2, 8), 0, VOCAB, dtype=jnp.int32)  # [B=2, S=8]

    model = AnnotatedLlamaPallas(params, layers=None)
    logits, int_values = model(tokens)

    jax.block_until_ready(logits)
    for i in int_values:
        jax.block_until_ready(int_values[i]["attn_probs"])
        jax.block_until_ready(int_values[i]["attn_output"])

    assert logits.shape == (2, 8, VOCAB)
    assert bool(jnp.all(jnp.isfinite(logits)))
    assert set(int_values.keys()) == set(range(N_LAYERS))
    assert int_values[0]["attn_probs"].shape == (2, N_HEADS, 8, 8)
    assert int_values[0]["attn_output"].shape == (2, 8, D_MODEL)

    probs0 = int_values[0]["attn_probs"]
    # exact softmax -> rows sum to 1
    row_sums = probs0.sum(-1)
    assert bool(jnp.all(jnp.abs(row_sums - 1.0) < 1e-4))
    # causal structure: strictly-upper-triangular entries are (near) zero
    upper = jnp.triu(jnp.ones((8, 8)), k=1)[None, None]
    assert bool(jnp.all(probs0 * upper < 1e-6))

    # no-annotation variant also runs
    model.toggle_layer(-1)          # disables collection on every layer
    logits2, int_values2 = model(tokens)
    jax.block_until_ready(logits2)
    assert int_values2 == {}
    assert bool(jnp.allclose(logits, logits2, atol=1e-5, rtol=1e-5))

    print("KERNEL_OK")
</pallas_src>

<mosaic_0001>
module attributes {stable_mosaic.version = 11 : i64} {
  func.func @kernel(%arg0: i32, %arg1: memref<16x128xf32, #tpu.memory_space<vmem>>, %arg2: memref<16x128xf32, #tpu.memory_space<vmem>>, %arg3: memref<16x128xf32, #tpu.memory_space<vmem>>, %arg4: memref<16x16xf32, #tpu.memory_space<vmem>>, %arg5: memref<1x1x128xf32, #tpu.memory_space<vmem>>, %arg6: memref<1x1x128xf32, #tpu.memory_space<vmem>>, %arg7: memref<1x128x640xbf16, #tpu.memory_space<vmem>>, %arg8: memref<1x128x128xbf16, #tpu.memory_space<vmem>>, %arg9: memref<1x128x512xbf16, #tpu.memory_space<vmem>>, %arg10: memref<1x256x128xbf16, #tpu.memory_space<vmem>>, %arg11: memref<1x128xf32, #tpu.memory_space<vmem>>, %arg12: memref<128x256xbf16, #tpu.memory_space<vmem>>, %arg13: memref<16x256xf32, #tpu.memory_space<vmem>>, %arg14: memref<1x4x16x16xf32, #tpu.memory_space<vmem>>, %arg15: memref<1x16x128xf32, #tpu.memory_space<vmem>>, %arg16: memref<16x128xf32, #tpu.memory_space<vmem>>) attributes {dimension_semantics = [#tpu.dimension_semantics<arbitrary>], iteration_bounds = array<i64: 2>, scalar_prefetch = 0 : i64, scratch_operands = 1 : i64, tpu.core_type = #tpu.core_type<tc>, window_params = [{pipeline_mode = #tpu.pipeline_mode<synchronous>, transform_indices = @transform_0, window_bounds = array<i64: 16, 128>}, {pipeline_mode = #tpu.pipeline_mode<synchronous>, transform_indices = @transform_1, window_bounds = array<i64: 16, 128>}, {pipeline_mode = #tpu.pipeline_mode<synchronous>, transform_indices = @transform_2, window_bounds = array<i64: 16, 128>}, {pipeline_mode = #tpu.pipeline_mode<synchronous>, transform_indices = @transform_3, window_bounds = array<i64: 16, 16>}, {transform_indices = @transform_4, window_bounds = array<i64: 1, 1, 128>}, {transform_indices = @transform_5, window_bounds = array<i64: 1, 1, 128>}, {transform_indices = @transform_6, window_bounds = array<i64: 1, 128, 640>}, {transform_indices = @transform_7, window_bounds = array<i64: 1, 128, 128>}, {transform_indices = @transform_8, window_bounds = array<i64: 1, 128, 512>}, {transform_indices = @transform_9, window_bounds = array<i64: 1, 256, 128>}, {pipeline_mode = #tpu.pipeline_mode<synchronous>, transform_indices = @transform_10, window_bounds = array<i64: 1, 128>}, {pipeline_mode = #tpu.pipeline_mode<synchronous>, transform_indices = @transform_11, window_bounds = array<i64: 128, 256>}, {pipeline_mode = #tpu.pipeline_mode<synchronous>, transform_indices = @transform_12, window_bounds = array<i64: 16, 256>}, {transform_indices = @transform_13, window_bounds = array<i64: 1, 4, 16, 16>}, {transform_indices = @transform_14, window_bounds = array<i64: 1, 16, 128>}]} {
    %c0_i32 = arith.constant 0 : i32
    %0 = arith.cmpi eq, %arg0, %c0_i32 : i32
    %1 = arith.extui %0 : i1 to i32
    %c0_i32_0 = arith.constant 0 : i32
    %2 = arith.cmpi ne, %1, %c0_i32_0 : i32
    scf.if %2 {
      %c0_85 = arith.constant 0 : index
      %c0_86 = arith.constant 0 : index
      %184 = vector.load %arg1[%c0_85, %c0_86] : memref<16x128xf32, #tpu.memory_space<vmem>>, vector<16x128xf32>
      %c0_87 = arith.constant 0 : index
      %c0_88 = arith.constant 0 : index
      %185 = vector.load %arg16[%c0_87, %c0_88] : memref<16x128xf32, #tpu.memory_space<vmem>>, vector<16x128xf32>
      tpu.vector_store %arg16[%c0_87, %c0_88], %184 {strides = array<i32>} : memref<16x128xf32, #tpu.memory_space<vmem>>, vector<16x128xf32>,
    } else {
    }
    %c0 = arith.constant 0 : index
    %c0_1 = arith.constant 0 : index
    %3 = vector.load %arg16[%c0, %c0_1] : memref<16x128xf32, #tpu.memory_space<vmem>>, vector<16x128xf32>
    %c0_2 = arith.constant 0 : index
    %c0_3 = arith.constant 0 : index
    %4 = vector.load %arg2[%c0_2, %c0_3] : memref<16x128xf32, #tpu.memory_space<vmem>>, vector<16x128xf32>
    %c0_4 = arith.constant 0 : index
    %c0_5 = arith.constant 0 : index
    %5 = vector.load %arg3[%c0_4, %c0_5] : memref<16x128xf32, #tpu.memory_space<vmem>>, vector<16x128xf32>
    %c0_6 = arith.constant 0 : index
    %c0_7 = arith.constant 0 : index
    %6 = vector.load %arg4[%c0_6, %c0_7] : memref<16x16xf32, #tpu.memory_space<vmem>>, vector<16x16xf32>
    %c0_8 = arith.constant 0 : index
    %c0_9 = arith.constant 0 : index
    %c0_10 = arith.constant 0 : index
    %7 = vector.load %arg5[%c0_8, %c0_9, %c0_10] : memref<1x1x128xf32, #tpu.memory_space<vmem>>, vector<1x1x128xf32>
    %8 = vector.shape_cast %7 : vector<1x1x128xf32> to vector<1x128xf32>
    %9 = arith.mulf %3, %3 : vector<16x128xf32>
    %cst = arith.constant dense<0.000000e+00> : vector<16xf32>
    %10 = vector.multi_reduction <add>, %9, %cst [1] : vector<16x128xf32> to vector<16xf32>
    %11 = vector.shape_cast %10 : vector<16xf32> to vector<16x1xf32>
    %cst_11 = arith.constant 1.280000e+02 : f32
    %12 = vector.broadcast %cst_11 : f32 to vector<16x1xf32>
    %13 = arith.divf %11, %12 : vector<16x1xf32>
    %cst_12 = arith.constant 9.99999997E-7 : f32
    %14 = vector.broadcast %cst_12 : f32 to vector<16x1xf32>
    %15 = arith.addf %13, %14 : vector<16x1xf32>
    %16 = math.rsqrt %15 : vector<16x1xf32>
    %17 = vector.broadcast %16 : vector<16x1xf32> to vector<16x128xf32>
    %18 = arith.mulf %3, %17 : vector<16x128xf32>
    %19 = vector.broadcast %8 : vector<1x128xf32> to vector<16x128xf32>
    %20 = arith.mulf %18, %19 : vector<16x128xf32>
    %21 = arith.truncf %20 : vector<16x128xf32> to vector<16x128xbf16>
    %c0_13 = arith.constant 0 : index
    %c0_14 = arith.constant 0 : index
    %c0_15 = arith.constant 0 : index
    %22 = vector.load %arg7[%c0_13, %c0_14, %c0_15] : memref<1x128x640xbf16, #tpu.memory_space<vmem>>, vector<1x128x640xbf16>
    %23 = vector.shape_cast %22 : vector<1x128x640xbf16> to vector<128x640xbf16>
    %cst_16 = arith.constant dense<0.000000e+00> : vector<16x640xf32>
    %24 = tpu.matmul %21, %23, %cst_16 {dimension_numbers = #tpu.dot_dimension_numbers<[1], [0], [0], [1], [0, 0, 1, 1], [], []>} : vector<16x128xbf16>, vector<128x640xbf16>, vector<16x640xf32> -> vector<16x640xf32>
    %25 = vector.extract_strided_slice %24 {offsets = [0, 0], sizes = [16, 128], strides = [1, 1]} : vector<16x640xf32> to vector<16x128xf32>
    %26 = vector.extract_strided_slice %24 {offsets = [0, 128], sizes = [16, 128], strides = [1, 1]} : vector<16x640xf32> to vector<16x128xf32>
    %27 = vector.extract_strided_slice %24 {offsets = [0, 256], sizes = [16, 128], strides = [1, 1]} : vector<16x640xf32> to vector<16x128xf32>
    %28 = vector.extract_strided_slice %24 {offsets = [0, 384], sizes = [16, 128], strides = [1, 1]} : vector<16x640xf32> to vector<16x128xf32>
    %29 = vector.extract_strided_slice %24 {offsets = [0, 512], sizes = [16, 128], strides = [1, 1]} : vector<16x640xf32> to vector<16x128xf32>
    %30 = arith.mulf %25, %4 : vector<16x128xf32>
    %31 = arith.mulf %26, %5 : vector<16x128xf32>
    %32 = arith.addf %30, %31 : vector<16x128xf32>
    %33 = arith.truncf %32 : vector<16x128xf32> to vector<16x128xbf16>
    %34 = arith.mulf %27, %4 : vector<16x128xf32>
    %35 = arith.mulf %28, %5 : vector<16x128xf32>
    %36 = arith.addf %34, %35 : vector<16x128xf32>
    %37 = arith.truncf %36 : vector<16x128xf32> to vector<16x128xbf16>
    %38 = arith.truncf %29 : vector<16x128xf32> to vector<16x128xbf16>
    %cst_17 = arith.constant 0.000000e+00 : f32
    %39 = vector.broadcast %cst_17 : f32 to vector<16x128xf32>
    %40 = vector.extract_strided_slice %33 {offsets = [0, 0], sizes = [16, 32], strides = [1, 1]} : vector<16x128xbf16> to vector<16x32xbf16>
    %41 = vector.extract_strided_slice %37 {offsets = [0, 0], sizes = [16, 32], strides = [1, 1]} : vector<16x128xbf16> to vector<16x32xbf16>
    %42 = vector.extract_strided_slice %38 {offsets = [0, 0], sizes = [16, 32], strides = [1, 1]} : vector<16x128xbf16> to vector<16x32xbf16>
    %cst_18 = arith.constant dense<0.000000e+00> : vector<16x16xf32>
    %43 = tpu.matmul %40, %41, %cst_18 {dimension_numbers = #tpu.dot_dimension_numbers<[1], [1], [0], [0], [0, 0, 1, 0], [], []>} : vector<16x32xbf16>, vector<16x32xbf16>, vector<16x16xf32> -> vector<16x16xf32>
    %cst_19 = arith.constant 0.176776692 : f32
    %44 = vector.broadcast %cst_19 : f32 to vector<16x16xf32>
    %45 = arith.mulf %43, %44 : vector<16x16xf32>
    %46 = arith.addf %45, %6 : vector<16x16xf32>
    %cst_20 = arith.constant dense<0xFF800000> : vector<16xf32>
    %47 = vector.multi_reduction <maximumf>, %46, %cst_20 [1] : vector<16x16xf32> to vector<16xf32>
    %48 = vector.shape_cast %47 : vector<16xf32> to vector<16x1xf32>
    %49 = vector.broadcast %48 : vector<16x1xf32> to vector<16x16xf32>
    %50 = arith.subf %46, %49 : vector<16x16xf32>
    %51 = math.exp %50 : vector<16x16xf32>
    %cst_21 = arith.constant dense<0.000000e+00> : vector<16xf32>
    %52 = vector.multi_reduction <add>, %51, %cst_21 [1] : vector<16x16xf32> to vector<16xf32>
    %53 = vector.shape_cast %52 : vector<16xf32> to vector<16x1xf32>
    %54 = vector.broadcast %53 : vector<16x1xf32> to vector<16x16xf32>
    %55 = arith.divf %51, %54 : vector<16x16xf32>
    %c0_22 = arith.constant 0 : index
    %c0_23 = arith.constant 0 : index
    %c0_24 = arith.constant 0 : index
    %c0_25 = arith.constant 0 : index
    %56 = vector.load %arg14[%c0_22, %c0_23, %c0_24, %c0_25] : memref<1x4x16x16xf32, #tpu.memory_space<vmem>>, vector<1x1x16x16xf32>
    %57 = vector.shape_cast %56 : vector<1x1x16x16xf32> to vector<16x16xf32>
    %58 = vector.shape_cast %55 : vector<16x16xf32> to vector<1x1x16x16xf32>
    tpu.vector_store %arg14[%c0_22, %c0_23, %c0_24, %c0_25], %58 {strides = array<i32>} : memref<1x4x16x16xf32, #tpu.memory_space<vmem>>, vector<1x1x16x16xf32>,
    %59 = arith.truncf %55 : vector<16x16xf32> to vector<16x16xbf16>
    %cst_26 = arith.constant dense<0.000000e+00> : vector<16x32xf32>
    %60 = tpu.matmul %59, %42, %cst_26 {dimension_numbers = #tpu.dot_dimension_numbers<[1], [0], [0], [1], [0, 0, 1, 1], [], []>} : vector<16x16xbf16>, vector<16x32xbf16>, vector<16x32xf32> -> vector<16x32xf32>
    %61 = arith.truncf %60 : vector<16x32xf32> to vector<16x32xbf16>
    %c0_27 = arith.constant 0 : index
    %c0_28 = arith.constant 0 : index
    %c0_29 = arith.constant 0 : index
    %62 = vector.load %arg8[%c0_27, %c0_28, %c0_29] : memref<1x128x128xbf16, #tpu.memory_space<vmem>>, vector<1x32x128xbf16>
    %63 = vector.shape_cast %62 : vector<1x32x128xbf16> to vector<32x128xbf16>
    %cst_30 = arith.constant dense<0.000000e+00> : vector<16x128xf32>
    %64 = tpu.matmul %61, %63, %cst_30 {dimension_numbers = #tpu.dot_dimension_numbers<[1], [0], [0], [1], [0, 0, 1, 1], [], []>} : vector<16x32xbf16>, vector<32x128xbf16>, vector<16x128xf32> -> vector<16x128xf32>
    %65 = arith.addf %39, %64 : vector<16x128xf32>
    %66 = vector.extract_strided_slice %33 {offsets = [0, 32], sizes = [16, 32], strides = [1, 1]} : vector<16x128xbf16> to vector<16x32xbf16>
    %67 = vector.extract_strided_slice %37 {offsets = [0, 32], sizes = [16, 32], strides = [1, 1]} : vector<16x128xbf16> to vector<16x32xbf16>
    %68 = vector.extract_strided_slice %38 {offsets = [0, 32], sizes = [16, 32], strides = [1, 1]} : vector<16x128xbf16> to vector<16x32xbf16>
    %cst_31 = arith.constant dense<0.000000e+00> : vector<16x16xf32>
    %69 = tpu.matmul %66, %67, %cst_31 {dimension_numbers = #tpu.dot_dimension_numbers<[1], [1], [0], [0], [0, 0, 1, 0], [], []>} : vector<16x32xbf16>, vector<16x32xbf16>, vector<16x16xf32> -> vector<16x16xf32>
    %cst_32 = arith.constant 0.176776692 : f32
    %70 = vector.broadcast %cst_32 : f32 to vector<16x16xf32>
    %71 = arith.mulf %69, %70 : vector<16x16xf32>
    %72 = arith.addf %71, %6 : vector<16x16xf32>
    %cst_33 = arith.constant dense<0xFF800000> : vector<16xf32>
    %73 = vector.multi_reduction <maximumf>, %72, %cst_33 [1] : vector<16x16xf32> to vector<16xf32>
    %74 = vector.shape_cast %73 : vector<16xf32> to vector<16x1xf32>
    %75 = vector.broadcast %74 : vector<16x1xf32> to vector<16x16xf32>
    %76 = arith.subf %72, %75 : vector<16x16xf32>
    %77 = math.exp %76 : vector<16x16xf32>
    %cst_34 = arith.constant dense<0.000000e+00> : vector<16xf32>
    %78 = vector.multi_reduction <add>, %77, %cst_34 [1] : vector<16x16xf32> to vector<16xf32>
    %79 = vector.shape_cast %78 : vector<16xf32> to vector<16x1xf32>
    %80 = vector.broadcast %79 : vector<16x1xf32> to vector<16x16xf32>
    %81 = arith.divf %77, %80 : vector<16x16xf32>
    %c0_35 = arith.constant 0 : index
    %c1 = arith.constant 1 : index
    %c0_36 = arith.constant 0 : index
    %c0_37 = arith.constant 0 : index
    %82 = vector.load %arg14[%c0_35, %c1, %c0_36, %c0_37] : memref<1x4x16x16xf32, #tpu.memory_space<vmem>>, vector<1x1x16x16xf32>
    %83 = vector.shape_cast %82 : vector<1x1x16x16xf32> to vector<16x16xf32>
    %84 = vector.shape_cast %81 : vector<16x16xf32> to vector<1x1x16x16xf32>
    tpu.vector_store %arg14[%c0_35, %c1, %c0_36, %c0_37], %84 {strides = array<i32>} : memref<1x4x16x16xf32, #tpu.memory_space<vmem>>, vector<1x1x16x16xf32>,
    %85 = arith.truncf %81 : vector<16x16xf32> to vector<16x16xbf16>
    %cst_38 = arith.constant dense<0.000000e+00> : vector<16x32xf32>
    %86 = tpu.matmul %85, %68, %cst_38 {dimension_numbers = #tpu.dot_dimension_numbers<[1], [0], [0], [1], [0, 0, 1, 1], [], []>} : vector<16x16xbf16>, vector<16x32xbf16>, vector<16x32xf32> -> vector<16x32xf32>
    %87 = arith.truncf %86 : vector<16x32xf32> to vector<16x32xbf16>
    %c0_39 = arith.constant 0 : index
    %c32 = arith.constant 32 : index
    %c0_40 = arith.constant 0 : index
    %88 = vector.load %arg8[%c0_39, %c32, %c0_40] : memref<1x128x128xbf16, #tpu.memory_space<vmem>>, vector<1x32x128xbf16>
    %89 = vector.shape_cast %88 : vector<1x32x128xbf16> to vector<32x128xbf16>
    %cst_41 = arith.constant dense<0.000000e+00> : vector<16x128xf32>
    %90 = tpu.matmul %87, %89, %cst_41 {dimension_numbers = #tpu.dot_dimension_numbers<[1], [0], [0], [1], [0, 0, 1, 1], [], []>} : vector<16x32xbf16>, vector<32x128xbf16>, vector<16x128xf32> -> vector<16x128xf32>
    %91 = arith.addf %65, %90 : vector<16x128xf32>
    %92 = vector.extract_strided_slice %33 {offsets = [0, 64], sizes = [16, 32], strides = [1, 1]} : vector<16x128xbf16> to vector<16x32xbf16>
    %93 = vector.extract_strided_slice %37 {offsets = [0, 64], sizes = [16, 32], strides = [1, 1]} : vector<16x128xbf16> to vector<16x32xbf16>
    %94 = vector.extract_strided_slice %38 {offsets = [0, 64], sizes = [16, 32], strides = [1, 1]} : vector<16x128xbf16> to vector<16x32xbf16>
    %cst_42 = arith.constant dense<0.000000e+00> : vector<16x16xf32>
    %95 = tpu.matmul %92, %93, %cst_42 {dimension_numbers = #tpu.dot_dimension_numbers<[1], [1], [0], [0], [0, 0, 1, 0], [], []>} : vector<16x32xbf16>, vector<16x32xbf16>, vector<16x16xf32> -> vector<16x16xf32>
    %cst_43 = arith.constant 0.176776692 : f32
    %96 = vector.broadcast %cst_43 : f32 to vector<16x16xf32>
    %97 = arith.mulf %95, %96 : vector<16x16xf32>
    %98 = arith.addf %97, %6 : vector<16x16xf32>
    %cst_44 = arith.constant dense<0xFF800000> : vector<16xf32>
    %99 = vector.multi_reduction <maximumf>, %98, %cst_44 [1] : vector<16x16xf32> to vector<16xf32>
    %100 = vector.shape_cast %99 : vector<16xf32> to vector<16x1xf32>
    %101 = vector.broadcast %100 : vector<16x1xf32> to vector<16x16xf32>
    %102 = arith.subf %98, %101 : vector<16x16xf32>
    %103 = math.exp %102 : vector<16x16xf32>
    %cst_45 = arith.constant dense<0.000000e+00> : vector<16xf32>
    %104 = vector.multi_reduction <add>, %103, %cst_45 [1] : vector<16x16xf32> to vector<16xf32>
    %105 = vector.shape_cast %104 : vector<16xf32> to vector<16x1xf32>
    %106 = vector.broadcast %105 : vector<16x1xf32> to vector<16x16xf32>
    %107 = arith.divf %103, %106 : vector<16x16xf32>
    %c0_46 = arith.constant 0 : index
    %c2 = arith.constant 2 : index
    %c0_47 = arith.constant 0 : index
    %c0_48 = arith.constant 0 : index
    %108 = vector.load %arg14[%c0_46, %c2, %c0_47, %c0_48] : memref<1x4x16x16xf32, #tpu.memory_space<vmem>>, vector<1x1x16x16xf32>
    %109 = vector.shape_cast %108 : vector<1x1x16x16xf32> to vector<16x16xf32>
    %110 = vector.shape_cast %107 : vector<16x16xf32> to vector<1x1x16x16xf32>
    tpu.vector_store %arg14[%c0_46, %c2, %c0_47, %c0_48], %110 {strides = array<i32>} : memref<1x4x16x16xf32, #tpu.memory_space<vmem>>, vector<1x1x16x16xf32>,
    %111 = arith.truncf %107 : vector<16x16xf32> to vector<16x16xbf16>
    %cst_49 = arith.constant dense<0.000000e+00> : vector<16x32xf32>
    %112 = tpu.matmul %111, %94, %cst_49 {dimension_numbers = #tpu.dot_dimension_numbers<[1], [0], [0], [1], [0, 0, 1, 1], [], []>} : vector<16x16xbf16>, vector<16x32xbf16>, vector<16x32xf32> -> vector<16x32xf32>
    %113 = arith.truncf %112 : vector<16x32xf32> to vector<16x32xbf16>
    %c0_50 = arith.constant 0 : index
    %c64 = arith.constant 64 : index
    %c0_51 = arith.constant 0 : index
    %114 = vector.load %arg8[%c0_50, %c64, %c0_51] : memref<1x128x128xbf16, #tpu.memory_space<vmem>>, vector<1x32x128xbf16>
    %115 = vector.shape_cast %114 : vector<1x32x128xbf16> to vector<32x128xbf16>
    %cst_52 = arith.constant dense<0.000000e+00> : vector<16x128xf32>
    %116 = tpu.matmul %113, %115, %cst_52 {dimension_numbers = #tpu.dot_dimension_numbers<[1], [0], [0], [1], [0, 0, 1, 1], [], []>} : vector<16x32xbf16>, vector<32x128xbf16>, vector<16x128xf32> -> vector<16x128xf32>
    %117 = arith.addf %91, %116 : vector<16x128xf32>
    %118 = vector.extract_strided_slice %33 {offsets = [0, 96], sizes = [16, 32], strides = [1, 1]} : vector<16x128xbf16> to vector<16x32xbf16>
    %119 = vector.extract_strided_slice %37 {offsets = [0, 96], sizes = [16, 32], strides = [1, 1]} : vector<16x128xbf16> to vector<16x32xbf16>
    %120 = vector.extract_strided_slice %38 {offsets = [0, 96], sizes = [16, 32], strides = [1, 1]} : vector<16x128xbf16> to vector<16x32xbf16>
    %cst_53 = arith.constant dense<0.000000e+00> : vector<16x16xf32>
    %121 = tpu.matmul %118, %119, %cst_53 {dimension_numbers = #tpu.dot_dimension_numbers<[1], [1], [0], [0], [0, 0, 1, 0], [], []>} : vector<16x32xbf16>, vector<16x32xbf16>, vector<16x16xf32> -> vector<16x16xf32>
    %cst_54 = arith.constant 0.176776692 : f32
    %122 = vector.broadcast %cst_54 : f32 to vector<16x16xf32>
    %123 = arith.mulf %121, %122 : vector<16x16xf32>
    %124 = arith.addf %123, %6 : vector<16x16xf32>
    %cst_55 = arith.constant dense<0xFF800000> : vector<16xf32>
    %125 = vector.multi_reduction <maximumf>, %124, %cst_55 [1] : vector<16x16xf32> to vector<16xf32>
    %126 = vector.shape_cast %125 : vector<16xf32> to vector<16x1xf32>
    %127 = vector.broadcast %126 : vector<16x1xf32> to vector<16x16xf32>
    %128 = arith.subf %124, %127 : vector<16x16xf32>
    %129 = math.exp %128 : vector<16x16xf32>
    %cst_56 = arith.constant dense<0.000000e+00> : vector<16xf32>
    %130 = vector.multi_reduction <add>, %129, %cst_56 [1] : vector<16x16xf32> to vector<16xf32>
    %131 = vector.shape_cast %130 : vector<16xf32> to vector<16x1xf32>
    %132 = vector.broadcast %131 : vector<16x1xf32> to vector<16x16xf32>
    %133 = arith.divf %129, %132 : vector<16x16xf32>
    %c0_57 = arith.constant 0 : index
    %c3 = arith.constant 3 : index
    %c0_58 = arith.constant 0 : index
    %c0_59 = arith.constant 0 : index
    %134 = vector.load %arg14[%c0_57, %c3, %c0_58, %c0_59] : memref<1x4x16x16xf32, #tpu.memory_space<vmem>>, vector<1x1x16x16xf32>
    %135 = vector.shape_cast %134 : vector<1x1x16x16xf32> to vector<16x16xf32>
    %136 = vector.shape_cast %133 : vector<16x16xf32> to vector<1x1x16x16xf32>
    tpu.vector_store %arg14[%c0_57, %c3, %c0_58, %c0_59], %136 {strides = array<i32>} : memref<1x4x16x16xf32, #tpu.memory_space<vmem>>, vector<1x1x16x16xf32>,
    %137 = arith.truncf %133 : vector<16x16xf32> to vector<16x16xbf16>
    %cst_60 = arith.constant dense<0.000000e+00> : vector<16x32xf32>
    %138 = tpu.matmul %137, %120, %cst_60 {dimension_numbers = #tpu.dot_dimension_numbers<[1], [0], [0], [1], [0, 0, 1, 1], [], []>} : vector<16x16xbf16>, vector<16x32xbf16>, vector<16x32xf32> -> vector<16x32xf32>
    %139 = arith.truncf %138 : vector<16x32xf32> to vector<16x32xbf16>
    %c0_61 = arith.constant 0 : index
    %c96 = arith.constant 96 : index
    %c0_62 = arith.constant 0 : index
    %140 = vector.load %arg8[%c0_61, %c96, %c0_62] : memref<1x128x128xbf16, #tpu.memory_space<vmem>>, vector<1x32x128xbf16>
    %141 = vector.shape_cast %140 : vector<1x32x128xbf16> to vector<32x128xbf16>
    %cst_63 = arith.constant dense<0.000000e+00> : vector<16x128xf32>
    %142 = tpu.matmul %139, %141, %cst_63 {dimension_numbers = #tpu.dot_dimension_numbers<[1], [0], [0], [1], [0, 0, 1, 1], [], []>} : vector<16x32xbf16>, vector<32x128xbf16>, vector<16x128xf32> -> vector<16x128xf32>
    %143 = arith.addf %117, %142 : vector<16x128xf32>
    %c0_64 = arith.constant 0 : index
    %c0_65 = arith.constant 0 : index
    %c0_66 = arith.constant 0 : index
    %144 = vector.load %arg15[%c0_64, %c0_65, %c0_66] : memref<1x16x128xf32, #tpu.memory_space<vmem>>, vector<1x16x128xf32>
    %145 = vector.shape_cast %144 : vector<1x16x128xf32> to vector<16x128xf32>
    %146 = vector.shape_cast %143 : vector<16x128xf32> to vector<1x16x128xf32>
    tpu.vector_store %arg15[%c0_64, %c0_65, %c0_66], %146 {strides = array<i32>} : memref<1x16x128xf32, #tpu.memory_space<vmem>>, vector<1x16x128xf32>,
    %147 = arith.addf %3, %143 : vector<16x128xf32>
    %c0_67 = arith.constant 0 : index
    %c0_68 = arith.constant 0 : index
    %c0_69 = arith.constant 0 : index
    %148 = vector.load %arg6[%c0_67, %c0_68, %c0_69] : memref<1x1x128xf32, #tpu.memory_space<vmem>>, vector<1x1x128xf32>
    %149 = vector.shape_cast %148 : vector<1x1x128xf32> to vector<1x128xf32>
    %150 = arith.mulf %147, %147 : vector<16x128xf32>
    %cst_70 = arith.constant dense<0.000000e+00> : vector<16xf32>
    %151 = vector.multi_reduction <add>, %150, %cst_70 [1] : vector<16x128xf32> to vector<16xf32>
    %152 = vector.shape_cast %151 : vector<16xf32> to vector<16x1xf32>
    %cst_71 = arith.constant 1.280000e+02 : f32
    %153 = vector.broadcast %cst_71 : f32 to vector<16x1xf32>
    %154 = arith.divf %152, %153 : vector<16x1xf32>
    %cst_72 = arith.constant 9.99999997E-7 : f32
    %155 = vector.broadcast %cst_72 : f32 to vector<16x1xf32>
    %156 = arith.addf %154, %155 : vector<16x1xf32>
    %157 = math.rsqrt %156 : vector<16x1xf32>
    %158 = vector.broadcast %157 : vector<16x1xf32> to vector<16x128xf32>
    %159 = arith.mulf %147, %158 : vector<16x128xf32>
    %160 = vector.broadcast %149 : vector<1x128xf32> to vector<16x128xf32>
    %161 = arith.mulf %159, %160 : vector<16x128xf32>
    %162 = arith.truncf %161 : vector<16x128xf32> to vector<16x128xbf16>
    %c0_73 = arith.constant 0 : index
    %c0_74 = arith.constant 0 : index
    %c0_75 = arith.constant 0 : index
    %163 = vector.load %arg9[%c0_73, %c0_74, %c0_75] : memref<1x128x512xbf16, #tpu.memory_space<vmem>>, vector<1x128x512xbf16>
    %164 = vector.shape_cast %163 : vector<1x128x512xbf16> to vector<128x512xbf16>
    %cst_76 = arith.constant dense<0.000000e+00> : vector<16x512xf32>
    %165 = tpu.matmul %162, %164, %cst_76 {dimension_numbers = #tpu.dot_dimension_numbers<[1], [0], [0], [1], [0, 0, 1, 1], [], []>} : vector<16x128xbf16>, vector<128x512xbf16>, vector<16x512xf32> -> vector<16x512xf32>
    %166 = vector.extract_strided_slice %165 {offsets = [0, 0], sizes = [16, 256], strides = [1, 1]} : vector<16x512xf32> to vector<16x256xf32>
    %167 = vector.extract_strided_slice %165 {offsets = [0, 256], sizes = [16, 256], strides = [1, 1]} : vector<16x512xf32> to vector<16x256xf32>
    %168 = arith.negf %166 : vector<16x256xf32>
    %169 = math.exp %168 : vector<16x256xf32>
    %cst_77 = arith.constant 1.000000e+00 : f32
    %170 = vector.broadcast %cst_77 : f32 to vector<16x256xf32>
    %171 = arith.addf %170, %169 : vector<16x256xf32>
    %172 = arith.divf %170, %171 : vector<16x256xf32>
    %173 = arith.mulf %166, %172 : vector<16x256xf32>
    %174 = arith.mulf %173, %167 : vector<16x256xf32>
    %175 = arith.truncf %174 : vector<16x256xf32> to vector<16x256xbf16>
    %c0_78 = arith.constant 0 : index
    %c0_79 = arith.constant 0 : index
    %c0_80 = arith.constant 0 : index
    %176 = vector.load %arg10[%c0_78, %c0_79, %c0_80] : memref<1x256x128xbf16, #tpu.memory_space<vmem>>, vector<1x256x128xbf16>
    %177 = vector.shape_cast %176 : vector<1x256x128xbf16> to vector<256x128xbf16>
    %cst_81 = arith.constant dense<0.000000e+00> : vector<16x128xf32>
    %178 = tpu.matmul %175, %177, %cst_81 {dimension_numbers = #tpu.dot_dimension_numbers<[1], [0], [0], [1], [0, 0, 1, 1], [], []>} : vector<16x256xbf16>, vector<256x128xbf16>, vector<16x128xf32> -> vector<16x128xf32>
    %179 = arith.addf %147, %178 : vector<16x128xf32>
    %c0_82 = arith.constant 0 : index
    %c0_83 = arith.constant 0 : index
    %180 = vector.load %arg16[%c0_82, %c0_83] : memref<16x128xf32, #tpu.memory_space<vmem>>, vector<16x128xf32>
    tpu.vector_store %arg16[%c0_82, %c0_83], %179 {strides = array<i32>} : memref<16x128xf32, #tpu.memory_space<vmem>>, vector<16x128xf32>,
    %c1_i32 = arith.constant 1 : i32
    %181 = arith.cmpi eq, %arg0, %c1_i32 : i32
    %182 = arith.extui %181 : i1 to i32
    %c0_i32_84 = arith.constant 0 : i32
    %183 = arith.cmpi ne, %182, %c0_i32_84 : i32
    scf.if %183 {
      %c0_85 = arith.constant 0 : index
      %c0_86 = arith.constant 0 : index
      %184 = vector.load %arg11[%c0_85, %c0_86] : memref<1x128xf32, #tpu.memory_space<vmem>>, vector<1x128xf32>
      %185 = arith.mulf %179, %179 : vector<16x128xf32>
      %cst_87 = arith.constant dense<0.000000e+00> : vector<16xf32>
      %186 = vector.multi_reduction <add>, %185, %cst_87 [1] : vector<16x128xf32> to vector<16xf32>
      %187 = vector.shape_cast %186 : vector<16xf32> to vector<16x1xf32>
      %cst_88 = arith.constant 1.280000e+02 : f32
      %188 = vector.broadcast %cst_88 : f32 to vector<16x1xf32>
      %189 = arith.divf %187, %188 : vector<16x1xf32>
      %cst_89 = arith.constant 9.99999997E-7 : f32
      %190 = vector.broadcast %cst_89 : f32 to vector<16x1xf32>
      %191 = arith.addf %189, %190 : vector<16x1xf32>
      %192 = math.rsqrt %191 : vector<16x1xf32>
      %193 = vector.broadcast %192 : vector<16x1xf32> to vector<16x128xf32>
      %194 = arith.mulf %179, %193 : vector<16x128xf32>
      %195 = vector.broadcast %184 : vector<1x128xf32> to vector<16x128xf32>
      %196 = arith.mulf %194, %195 : vector<16x128xf32>
      %197 = arith.truncf %196 : vector<16x128xf32> to vector<16x128xbf16>
      %c0_90 = arith.constant 0 : index
      %c0_91 = arith.constant 0 : index
      %198 = vector.load %arg12[%c0_90, %c0_91] : memref<128x256xbf16, #tpu.memory_space<vmem>>, vector<128x256xbf16>
      %cst_92 = arith.constant dense<0.000000e+00> : vector<16x256xf32>
      %199 = tpu.matmul %197, %198, %cst_92 {dimension_numbers = #tpu.dot_dimension_numbers<[1], [0], [0], [1], [0, 0, 1, 1], [], []>} : vector<16x128xbf16>, vector<128x256xbf16>, vector<16x256xf32> -> vector<16x256xf32>
      %c0_93 = arith.constant 0 : index
      %c0_94 = arith.constant 0 : index
      %200 = vector.load %arg13[%c0_93, %c0_94] : memref<16x256xf32, #tpu.memory_space<vmem>>, vector<16x256xf32>
      tpu.vector_store %arg13[%c0_93, %c0_94], %199 {strides = array<i32>} : memref<16x256xf32, #tpu.memory_space<vmem>>, vector<16x256xf32>,
    } else {
    }
    return
  }
  func.func @transform_0(%arg0: i32) -> (i32, i32) {
    %c0_i32 = arith.constant 0 : i32
    %c0_i32_0 = arith.constant 0 : i32
    %c0_i32_1 = arith.constant 0 : i32
    return %c0_i32, %c0_i32_0 : i32, i32
  }
  func.func @transform_1(%arg0: i32) -> (i32, i32) {
    %c0_i32 = arith.constant 0 : i32
    %c0_i32_0 = arith.constant 0 : i32
    %c0_i32_1 = arith.constant 0 : i32
    return %c0_i32, %c0_i32_0 : i32, i32
  }
  func.func @transform_2(%arg0: i32) -> (i32, i32) {
    %c0_i32 = arith.constant 0 : i32
    %c0_i32_0 = arith.constant 0 : i32
    %c0_i32_1 = arith.constant 0 : i32
    return %c0_i32, %c0_i32_0 : i32, i32
  }
  func.func @transform_3(%arg0: i32) -> (i32, i32) {
    %c0_i32 = arith.constant 0 : i32
    %c0_i32_0 = arith.constant 0 : i32
    %c0_i32_1 = arith.constant 0 : i32
    return %c0_i32, %c0_i32_0 : i32, i32
  }
  func.func @transform_4(%arg0: i32) -> (i32, i32, i32) {
    %c0_i32 = arith.constant 0 : i32
    %c0_i32_0 = arith.constant 0 : i32
    %c0_i32_1 = arith.constant 0 : i32
    return %arg0, %c0_i32, %c0_i32_0 : i32, i32, i32
  }
  func.func @transform_5(%arg0: i32) -> (i32, i32, i32) {
    %c0_i32 = arith.constant 0 : i32
    %c0_i32_0 = arith.constant 0 : i32
    %c0_i32_1 = arith.constant 0 : i32
    return %arg0, %c0_i32, %c0_i32_0 : i32, i32, i32
  }
  func.func @transform_6(%arg0: i32) -> (i32, i32, i32) {
    %c0_i32 = arith.constant 0 : i32
    %c0_i32_0 = arith.constant 0 : i32
    %c0_i32_1 = arith.constant 0 : i32
    return %arg0, %c0_i32, %c0_i32_0 : i32, i32, i32
  }
  func.func @transform_7(%arg0: i32) -> (i32, i32, i32) {
    %c0_i32 = arith.constant 0 : i32
    %c0_i32_0 = arith.constant 0 : i32
    %c0_i32_1 = arith.constant 0 : i32
    return %arg0, %c0_i32, %c0_i32_0 : i32, i32, i32
  }
  func.func @transform_8(%arg0: i32) -> (i32, i32, i32) {
    %c0_i32 = arith.constant 0 : i32
    %c0_i32_0 = arith.constant 0 : i32
    %c0_i32_1 = arith.constant 0 : i32
    return %arg0, %c0_i32, %c0_i32_0 : i32, i32, i32
  }
  func.func @transform_9(%arg0: i32) -> (i32, i32, i32) {
    %c0_i32 = arith.constant 0 : i32
    %c0_i32_0 = arith.constant 0 : i32
    %c0_i32_1 = arith.constant 0 : i32
    return %arg0, %c0_i32, %c0_i32_0 : i32, i32, i32
  }
  func.func @transform_10(%arg0: i32) -> (i32, i32) {
    %c0_i32 = arith.constant 0 : i32
    %c0_i32_0 = arith.constant 0 : i32
    %c0_i32_1 = arith.constant 0 : i32
    return %c0_i32, %c0_i32_0 : i32, i32
  }
  func.func @transform_11(%arg0: i32) -> (i32, i32) {
    %c0_i32 = arith.constant 0 : i32
    %c0_i32_0 = arith.constant 0 : i32
    %c0_i32_1 = arith.constant 0 : i32
    return %c0_i32, %c0_i32_0 : i32, i32
  }
  func.func @transform_12(%arg0: i32) -> (i32, i32) {
    %c0_i32 = arith.constant 0 : i32
    %c0_i32_0 = arith.constant 0 : i32
    %c0_i32_1 = arith.constant 0 : i32
    return %c0_i32, %c0_i32_0 : i32, i32
  }
  func.func @transform_13(%arg0: i32) -> (i32, i32, i32, i32) {
    %c0_i32 = arith.constant 0 : i32
    %c0_i32_0 = arith.constant 0 : i32
    %c0_i32_1 = arith.constant 0 : i32
    %c0_i32_2 = arith.constant 0 : i32
    return %arg0, %c0_i32, %c0_i32_0, %c0_i32_1 : i32, i32, i32, i32
  }
  func.func @transform_14(%arg0: i32) -> (i32, i32, i32) {
    %c0_i32 = arith.constant 0 : i32
    %c0_i32_0 = arith.constant 0 : i32
    %c0_i32_1 = arith.constant 0 : i32
    return %arg0, %c0_i32, %c0_i32_0 : i32, i32, i32
  }
}

</mosaic_0001>

<llo_original>
// kernel: llama_forward.1
$region0: #{llama_forward.1}
  #allocation0 [shape = 'u32[]', space=smem, size = 0x4, offset = 0x4, fixed_abs, tag = 'smem constant byte address 0x4 - core index']
  #allocation1 [shape = 'u32[144,128]{1,0:T(1,128)}', space=vmem, size = 0x12000, scoped, tag = 'internal scratch']
  #allocation2 [shape = 'f32[16,128]{1,0:T(8,128)}', space=vmem, size = 0x2000, scoped, tag = 'scratch operand']
  %s0 = inlined_call_operand.vmem [shape: f32[16,128], index: 0, kind: input, shape index: {}]
  %s1 = inlined_call_operand.vmem [shape: f32[16,128], index: 1, kind: input, shape index: {}]
  %s2 = inlined_call_operand.vmem [shape: f32[16,128], index: 2, kind: input, shape index: {}]
  %s3 = inlined_call_operand.vmem [shape: f32[16,16], index: 3, kind: input, shape index: {}]
  %s4 = inlined_call_operand.vmem [shape: f32[2,1,128], index: 4, kind: input, shape index: {}]
  %s5 = inlined_call_operand.vmem [shape: f32[2,1,128], index: 5, kind: input, shape index: {}]
  %s6 = inlined_call_operand.hbm [shape: bf16[2,128,640], index: 6, kind: input, shape index: {}]
  %s7 = inlined_call_operand.vmem [shape: bf16[2,128,128], index: 7, kind: input, shape index: {}]
  %s8 = inlined_call_operand.hbm [shape: bf16[2,128,512], index: 8, kind: input, shape index: {}]
  %s9 = inlined_call_operand.vmem [shape: bf16[2,256,128], index: 9, kind: input, shape index: {}]
  %s10 = inlined_call_operand.vmem [shape: f32[1,128], index: 10, kind: input, shape index: {}]
  %s11 = inlined_call_operand.hbm [shape: bf16[128,256], index: 11, kind: input, shape index: {}]
  %s12 = inlined_call_operand.hbm [shape: f32[16,256], index: 12, kind: output, shape index: {0}]
  %s13 = inlined_call_operand.vmem [shape: f32[2,4,16,16], index: 13, kind: output, shape index: {1}]
  %s14 = inlined_call_operand.vmem [shape: f32[2,16,128], index: 14, kind: output, shape index: {2}]
  %15 = xla_tuple %s12, %s13, %s14
  %s16 = sld [smem:[#allocation0]]
  $region117: #{llama_forward.1} parent=0
    _
  %s18 = ssub.s32 1, %s16
  %s19 = scalar_select 0, %s18, %s16
  $region1: #{llama_forward.1} parent=0
    #allocation3 [shape = 'u8[327680]{0}', space=vmem, size = 0x50000, scoped, tag = 'input window, operand 6']
    #allocation4 [shape = 's32[2]{0}', space=sflag, size = 0x8, scoped, tag = 'scoped memory for llama_forward.1']
    #allocation5 [shape = 's32[2]{0}', space=sflag, size = 0x8, scoped, tag = 'scoped memory for llama_forward.1']
    #allocation6 [shape = 'u8[262144]{0}', space=vmem, size = 0x40000, scoped, tag = 'input window, operand 8']
    #allocation7 [shape = 's32[2]{0}', space=sflag, size = 0x8, scoped, tag = 'scoped memory for llama_forward.1']
    #allocation8 [shape = 'u8[65536]{0}', space=vmem, size = 0x10000, scoped, tag = 'input window, operand 11, single buffered']
    #allocation9 [shape = 'u8[16384]{0}', space=vmem, size = 0x4000, scoped, tag = 'output window, operand 0, single buffered']
    %20 = vsyncpa [#allocation4], 0
    %s21 = scalar_lea.sflag [#allocation4], 1
    %22 = vsyncpa %s21, 0
    %23 = vsyncpa [#allocation7], 0
    %s24 = scalar_lea.sflag [#allocation7], 1
    %25 = vsyncpa %s24, 0
    %26 = vsyncpa [#allocation5], 0
    loop: start=0, step=1, limit=4
    $region2: #{llama_forward.1} parent=1 // loop_pre_header
      _
    $region3: #{llama_forward.1} parent=1 // loop_header
      %s28 = sphi 0, %s32
      %p29 = scmp.ge.s32.totalorder %s28, 4
      %s36 = sphi 0, %s36
      %s38 = sphi 0, %s36
      %s39 = sphi 0, %s38
      %s53 = sphi 0, %s39
      %s57 = sphi 0, %s57
      %s59 = sphi 0, %s57
      %s60 = sphi 0, %s59
      %s74 = sphi 0, %s60
      %s78 = sphi 0, %s78
      %s80 = sphi 0, %s78
      %s81 = sphi 0, %s80
      %s95 = sphi 0, %s81
      %s99 = sphi 0, %s99
      %s101 = sphi 0, %s99
      %s102 = sphi 0, %s101
      %s116 = sphi 0, %s102
      %s122 = sphi 0, %s124
      %s125 = sphi 0, %s122
      %s126 = sphi 0, %s125
      %s142 = sphi 0, %s126
      %s148 = sphi 0, %s150
      %s151 = sphi 0, %s148
      %s152 = sphi 0, %s151
      %s168 = sphi 0, %s152
      %s174 = sphi 0, %s176
      %s177 = sphi 0, %s174
      %s178 = sphi 0, %s177
      %s194 = sphi 0, %s178
      %s200 = sphi 0, %s202
      %s203 = sphi 0, %s200
      %s204 = sphi 0, %s203
      %s220 = sphi 0, %s204
      %s226 = sphi 0, %s228
      %s229 = sphi 0, %s226
      %s230 = sphi 0, %s229
      %s246 = sphi 0, %s230
      %s252 = sphi 0, %s254
      %s255 = sphi 0, %s252
      %s256 = sphi 0, %s255
      %s272 = sphi 0, %s256
      %s276 = sphi 0, %s276
      %s278 = sphi 0, %s276
      %s279 = sphi 0, %s278
      %s293 = sphi 0, %s279
      %s297 = sphi 0, %s297
      %s299 = sphi 0, %s297
      %s300 = sphi 0, %s299
      %s314 = sphi 0, %s300
      %s318 = sphi 0, %s318
      %s320 = sphi 0, %s318
      %s321 = sphi 0, %s320
      %s335 = sphi 0, %s321
      %s341 = sphi 0, %s343
      %s344 = sphi 0, %s341
      %s345 = sphi 0, %s344
      %s361 = sphi 0, %s345
      %s367 = sphi 0, %s369
      %s370 = sphi 0, %s367
      %s371 = sphi 0, %s370
      %s387 = sphi 0, %s371
    $region4: #{llama_forward.1} parent=1 // loop_header_branch
      %31 = sbr.rel (%p29) target = $region8
    $region5: #{llama_forward.1} parent=1 // loop_body
      %s33 = ssub.s32 %s28, 1
      %s34 = ssub.s32 %s28, 2
      %s35 = sadd.s32 %s28, 1
      %s37 = sadd.s32 %s36, 1
      %p40 = scmp.eq.s32.totalorder %s28, 1
      %p41 = scmp.ne.s32.totalorder %s36, %s38
      %p42 = scmp.eq.s32.totalorder %s28, 0
      %p43 = por %p41, %p42
      %p44 = scmp.ne.s32.totalorder %s36, %s38
      %p45 = scmp.eq.s32.totalorder %s33, 1
      %p46 = por %p44, %p45
      %p47 = scmp.ne.s32.totalorder %s38, %s39
      %p48 = scmp.eq.s32.totalorder %s33, 0
      %p49 = por %p47, %p48
      %p50 = scmp.ne.s32.totalorder %s38, %s39
      %p51 = scmp.eq.s32.totalorder %s34, 1
      %p52 = por %p50, %p51
      %p54 = scmp.ne.s32.totalorder %s39, %s53
      %p55 = scmp.eq.s32.totalorder %s34, 0
      %p56 = por %p54, %p55
      %s58 = sadd.s32 %s57, 1
      %p61 = scmp.eq.s32.totalorder %s28, 1
      %p62 = scmp.ne.s32.totalorder %s57, %s59
      %p63 = scmp.eq.s32.totalorder %s28, 0
      %p64 = por %p62, %p63
      %p65 = scmp.ne.s32.totalorder %s57, %s59
      %p66 = scmp.eq.s32.totalorder %s33, 1
      %p67 = por %p65, %p66
      %p68 = scmp.ne.s32.totalorder %s59, %s60
      %p69 = scmp.eq.s32.totalorder %s33, 0
      %p70 = por %p68, %p69
      %p71 = scmp.ne.s32.totalorder %s59, %s60
      %p72 = scmp.eq.s32.totalorder %s34, 1
      %p73 = por %p71, %p72
      %p75 = scmp.ne.s32.totalorder %s60, %s74
      %p76 = scmp.eq.s32.totalorder %s34, 0
      %p77 = por %p75, %p76
      %s79 = sadd.s32 %s78, 1
      %p82 = scmp.eq.s32.totalorder %s28, 1
      %p83 = scmp.ne.s32.totalorder %s78, %s80
      %p84 = scmp.eq.s32.totalorder %s28, 0
      %p85 = por %p83, %p84
      %p86 = scmp.ne.s32.totalorder %s78, %s80
      %p87 = scmp.eq.s32.totalorder %s33, 1
      %p88 = por %p86, %p87
      %p89 = scmp.ne.s32.totalorder %s80, %s81
      %p90 = scmp.eq.s32.totalorder %s33, 0
      %p91 = por %p89, %p90
      %p92 = scmp.ne.s32.totalorder %s80, %s81
      %p93 = scmp.eq.s32.totalorder %s34, 1
      %p94 = por %p92, %p93
      %p96 = scmp.ne.s32.totalorder %s81, %s95
      %p97 = scmp.eq.s32.totalorder %s34, 0
      %p98 = por %p96, %p97
      %s100 = sadd.s32 %s99, 1
      %p103 = scmp.eq.s32.totalorder %s28, 1
      %p104 = scmp.ne.s32.totalorder %s99, %s101
      %p105 = scmp.eq.s32.totalorder %s28, 0
      %p106 = por %p104, %p105
      %p107 = scmp.ne.s32.totalorder %s99, %s101
      %p108 = scmp.eq.s32.totalorder %s33, 1
      %p109 = por %p107, %p108
      %p110 = scmp.ne.s32.totalorder %s101, %s102
      %p111 = scmp.eq.s32.totalorder %s33, 0
      %p112 = por %p110, %p111
      %p113 = scmp.ne.s32.totalorder %s101, %s102
      %p114 = scmp.eq.s32.totalorder %s34, 1
      %p115 = por %p113, %p114
      %p117 = scmp.ne.s32.totalorder %s102, %s116
      %p118 = scmp.eq.s32.totalorder %s34, 0
      %p119 = por %p117, %p118
      %s120 = ssub.s32 %s28, %s35
      %p121 = scmp.eq.s32.totalorder %s120, 0
      %s123 = sadd.s32 %s122, 1
      %s124 = scalar_select %p121, %s122, %s123
      %p127 = pneg %p121
      %p128 = scmp.eq.s32.totalorder %s28, 1
      %p129 = por %p127, %p128
      %p130 = scmp.ne.s32.totalorder %s122, %s125
      %p131 = scmp.eq.s32.totalorder %s28, 0
      %p132 = por %p130, %p131
      %p133 = scmp.ne.s32.totalorder %s122, %s125
      %p134 = scmp.eq.s32.totalorder %s33, 1
      %p135 = por %p133, %p134
      %p136 = scmp.ne.s32.totalorder %s125, %s126
      %p137 = scmp.eq.s32.totalorder %s33, 0
      %p138 = por %p136, %p137
      %p139 = scmp.ne.s32.totalorder %s125, %s126
      %p140 = scmp.eq.s32.totalorder %s34, 1
      %p141 = por %p139, %p140
      %p143 = scmp.ne.s32.totalorder %s126, %s142
      %p144 = scmp.eq.s32.totalorder %s34, 0
      %p145 = por %p143, %p144
      %s146 = ssub.s32 %s28, %s35
      %p147 = scmp.eq.s32.totalorder %s146, 0
      %s149 = sadd.s32 %s148, 1
      %s150 = scalar_select %p147, %s148, %s149
      %p153 = pneg %p147
      %p154 = scmp.eq.s32.totalorder %s28, 1
      %p155 = por %p153, %p154
      %p156 = scmp.ne.s32.totalorder %s148, %s151
      %p157 = scmp.eq.s32.totalorder %s28, 0
      %p158 = por %p156, %p157
      %p159 = scmp.ne.s32.totalorder %s148, %s151
      %p160 = scmp.eq.s32.totalorder %s33, 1
      %p161 = por %p159, %p160
      %p162 = scmp.ne.s32.totalorder %s151, %s152
      %p163 = scmp.eq.s32.totalorder %s33, 0
      %p164 = por %p162, %p163
      %p165 = scmp.ne.s32.totalorder %s151, %s152
      %p166 = scmp.eq.s32.totalorder %s34, 1
      %p167 = por %p165, %p166
      %p169 = scmp.ne.s32.totalorder %s152, %s168
      %p170 = scmp.eq.s32.totalorder %s34, 0
      %p171 = por %p169, %p170
      %s172 = ssub.s32 %s28, %s35
      %p173 = scmp.eq.s32.totalorder %s172, 0
      %s175 = sadd.s32 %s174, 1
      %s176 = scalar_select %p173, %s174, %s175
      %p179 = pneg %p173
      %p180 = scmp.eq.s32.totalorder %s28, 1
      %p181 = por %p179, %p180
      %p182 = scmp.ne.s32.totalorder %s174, %s177
      %p183 = scmp.eq.s32.totalorder %s28, 0
      %p184 = por %p182, %p183
      %p185 = scmp.ne.s32.totalorder %s174, %s177
      %p186 = scmp.eq.s32.totalorder %s33, 1
      %p187 = por %p185, %p186
      %p188 = scmp.ne.s32.totalorder %s177, %s178
      %p189 = scmp.eq.s32.totalorder %s33, 0
      %p190 = por %p188, %p189
      %p191 = scmp.ne.s32.totalorder %s177, %s178
      %p192 = scmp.eq.s32.totalorder %s34, 1
      %p193 = por %p191, %p192
      %p195 = scmp.ne.s32.totalorder %s178, %s194
      %p196 = scmp.eq.s32.totalorder %s34, 0
      %p197 = por %p195, %p196
      %s198 = ssub.s32 %s28, %s35
      %p199 = scmp.eq.s32.totalorder %s198, 0
      %s201 = sadd.s32 %s200, 1
      %s202 = scalar_select %p199, %s200, %s201
      %p205 = pneg %p199
      %p206 = scmp.eq.s32.totalorder %s28, 1
      %p207 = por %p205, %p206
      %p208 = scmp.ne.s32.totalorder %s200, %s203
      %p209 = scmp.eq.s32.totalorder %s28, 0
      %p210 = por %p208, %p209
      %p211 = scmp.ne.s32.totalorder %s200, %s203
      %p212 = scmp.eq.s32.totalorder %s33, 1
      %p213 = por %p211, %p212
      %p214 = scmp.ne.s32.totalorder %s203, %s204
      %p215 = scmp.eq.s32.totalorder %s33, 0
      %p216 = por %p214, %p215
      %p217 = scmp.ne.s32.totalorder %s203, %s204
      %p218 = scmp.eq.s32.totalorder %s34, 1
      %p219 = por %p217, %p218
      %p221 = scmp.ne.s32.totalorder %s204, %s220
      %p222 = scmp.eq.s32.totalorder %s34, 0
      %p223 = por %p221, %p222
      %s224 = ssub.s32 %s28, %s35
      %p225 = scmp.eq.s32.totalorder %s224, 0
      %s227 = sadd.s32 %s226, 1
      %s228 = scalar_select %p225, %s226, %s227
      %p231 = pneg %p225
      %p232 = scmp.eq.s32.totalorder %s28, 1
      %p233 = por %p231, %p232
      %p234 = scmp.ne.s32.totalorder %s226, %s229
      %p235 = scmp.eq.s32.totalorder %s28, 0
      %p236 = por %p234, %p235
      %p237 = scmp.ne.s32.totalorder %s226, %s229
      %p238 = scmp.eq.s32.totalorder %s33, 1
      %p239 = por %p237, %p238
      %p240 = scmp.ne.s32.totalorder %s229, %s230
      %p241 = scmp.eq.s32.totalorder %s33, 0
      %p242 = por %p240, %p241
      %p243 = scmp.ne.s32.totalorder %s229, %s230
      %p244 = scmp.eq.s32.totalorder %s34, 1
      %p245 = por %p243, %p244
      %p247 = scmp.ne.s32.totalorder %s230, %s246
      %p248 = scmp.eq.s32.totalorder %s34, 0
      %p249 = por %p247, %p248
      %s250 = ssub.s32 %s28, %s35
      %p251 = scmp.eq.s32.totalorder %s250, 0
      %s253 = sadd.s32 %s252, 1
      %s254 = scalar_select %p251, %s252, %s253
      %p257 = pneg %p251
      %p258 = scmp.eq.s32.totalorder %s28, 1
      %p259 = por %p257, %p258
      %p260 = scmp.ne.s32.totalorder %s252, %s255
      %p261 = scmp.eq.s32.totalorder %s28, 0
      %p262 = por %p260, %p261
      %p263 = scmp.ne.s32.totalorder %s252, %s255
      %p264 = scmp.eq.s32.totalorder %s33, 1
      %p265 = por %p263, %p264
      %p266 = scmp.ne.s32.totalorder %s255, %s256
      %p267 = scmp.eq.s32.totalorder %s33, 0
      %p268 = por %p266, %p267
      %p269 = scmp.ne.s32.totalorder %s255, %s256
      %p270 = scmp.eq.s32.totalorder %s34, 1
      %p271 = por %p269, %p270
      %p273 = scmp.ne.s32.totalorder %s256, %s272
      %p274 = scmp.eq.s32.totalorder %s34, 0
      %p275 = por %p273, %p274
      %s277 = sadd.s32 %s276, 1
      %p280 = scmp.eq.s32.totalorder %s28, 1
      %p281 = scmp.ne.s32.totalorder %s276, %s278
      %p282 = scmp.eq.s32.totalorder %s28, 0
      %p283 = por %p281, %p282
      %p284 = scmp.ne.s32.totalorder %s276, %s278
      %p285 = scmp.eq.s32.totalorder %s33, 1
      %p286 = por %p284, %p285
      %p287 = scmp.ne.s32.totalorder %s278, %s279
      %p288 = scmp.eq.s32.totalorder %s33, 0
      %p289 = por %p287, %p288
      %p290 = scmp.ne.s32.totalorder %s278, %s279
      %p291 = scmp.eq.s32.totalorder %s34, 1
      %p292 = por %p290, %p291
      %p294 = scmp.ne.s32.totalorder %s279, %s293
      %p295 = scmp.eq.s32.totalorder %s34, 0
      %p296 = por %p294, %p295
      %s298 = sadd.s32 %s297, 1
      %p301 = scmp.eq.s32.totalorder %s28, 1
      %p302 = scmp.ne.s32.totalorder %s297, %s299
      %p303 = scmp.eq.s32.totalorder %s28, 0
      %p304 = por %p302, %p303
      %p305 = scmp.ne.s32.totalorder %s297, %s299
      %p306 = scmp.eq.s32.totalorder %s33, 1
      %p307 = por %p305, %p306
      %p308 = scmp.ne.s32.totalorder %s299, %s300
      %p309 = scmp.eq.s32.totalorder %s33, 0
      %p310 = por %p308, %p309
      %p311 = scmp.ne.s32.totalorder %s299, %s300
      %p312 = scmp.eq.s32.totalorder %s34, 1
      %p313 = por %p311, %p312
      %p315 = scmp.ne.s32.totalorder %s300, %s314
      %p316 = scmp.eq.s32.totalorder %s34, 0
      %p317 = por %p315, %p316
      %s319 = sadd.s32 %s318, 1
      %p322 = scmp.eq.s32.totalorder %s28, 1
      %p323 = scmp.ne.s32.totalorder %s318, %s320
      %p324 = scmp.eq.s32.totalorder %s28, 0
      %p325 = por %p323, %p324
      %p326 = scmp.ne.s32.totalorder %s318, %s320
      %p327 = scmp.eq.s32.totalorder %s33, 1
      %p328 = por %p326, %p327
      %p329 = scmp.ne.s32.totalorder %s320, %s321
      %p330 = scmp.eq.s32.totalorder %s33, 0
      %p331 = por %p329, %p330
      %p332 = scmp.ne.s32.totalorder %s320, %s321
      %p333 = scmp.eq.s32.totalorder %s34, 1
      %p334 = por %p332, %p333
      %p336 = scmp.ne.s32.totalorder %s321, %s335
      %p337 = scmp.eq.s32.totalorder %s34, 0
      %p338 = por %p336, %p337
      %s339 = ssub.s32 %s28, %s35
      %p340 = scmp.eq.s32.totalorder %s339, 0
      %s342 = sadd.s32 %s341, 1
      %s343 = scalar_select %p340, %s341, %s342
      %p346 = pneg %p340
      %p347 = scmp.eq.s32.totalorder %s28, 1
      %p348 = por %p346, %p347
      %p349 = scmp.ne.s32.totalorder %s341, %s344
      %p350 = scmp.eq.s32.totalorder %s28, 0
      %p351 = por %p349, %p350
      %p352 = scmp.ne.s32.totalorder %s341, %s344
      %p353 = scmp.eq.s32.totalorder %s33, 1
      %p354 = por %p352, %p353
      %p355 = scmp.ne.s32.totalorder %s344, %s345
      %p356 = scmp.eq.s32.totalorder %s33, 0
      %p357 = por %p355, %p356
      %p358 = scmp.ne.s32.totalorder %s344, %s345
      %p359 = scmp.eq.s32.totalorder %s34, 1
      %p360 = por %p358, %p359
      %p362 = scmp.ne.s32.totalorder %s345, %s361
      %p363 = scmp.eq.s32.totalorder %s34, 0
      %p364 = por %p362, %p363
      %s365 = ssub.s32 %s28, %s35
      %p366 = scmp.eq.s32.totalorder %s365, 0
      %s368 = sadd.s32 %s367, 1
      %s369 = scalar_select %p366, %s367, %s368
      %p372 = pneg %p366
      %p373 = scmp.eq.s32.totalorder %s28, 1
      %p374 = por %p372, %p373
      %p375 = scmp.ne.s32.totalorder %s367, %s370
      %p376 = scmp.eq.s32.totalorder %s28, 0
      %p377 = por %p375, %p376
      %p378 = scmp.ne.s32.totalorder %s367, %s370
      %p379 = scmp.eq.s32.totalorder %s33, 1
      %p380 = por %p378, %p379
      %p381 = scmp.ne.s32.totalorder %s370, %s371
      %p382 = scmp.eq.s32.totalorder %s33, 0
      %p383 = por %p381, %p382
      %p384 = scmp.ne.s32.totalorder %s370, %s371
      %p385 = scmp.eq.s32.totalorder %s34, 1
      %p386 = por %p384, %p385
      %p388 = scmp.ne.s32.totalorder %s371, %s387
      %p389 = scmp.eq.s32.totalorder %s34, 0
      %p390 = por %p388, %p389
      %p391 = scmp.le.s32.totalorder 1, %s28
      %p392 = scmp.lt.s32.totalorder %s28, 3
      %p393 = pnand %p391, %p392
      %p394 = pneg %p393
      // Predicated region
      $region9: #{llama_forward.1} parent=5 // pred_check
        _
      $region10: #{llama_forward.1} parent=5 // pred_check_branch
        %396 = sbr.rel (%p393) target = $region12
      $region11: #{llama_forward.1} parent=5 // pred_region
        %s397 = ssub.s32 %s28, 1
        // Predicated region
        $region13: #{llama_forward.1} parent=11 // pred_check
          %p398 = pneg %p49
        $region14: #{llama_forward.1} parent=11 // pred_check_branch
          %400 = sbr.rel (%p398) target = $region16
        $region15: #{llama_forward.1} parent=11 // pred_region
          _
        $region16: #{llama_forward.1} parent=11 // pred_fallthru
          _
        // Predicated region
        $region17: #{llama_forward.1} parent=11 // pred_check
          %p401 = pneg %p70
        $region18: #{llama_forward.1} parent=11 // pred_check_branch
          %403 = sbr.rel (%p401) target = $region20
        $region19: #{llama_forward.1} parent=11 // pred_region
          _
        $region20: #{llama_forward.1} parent=11 // pred_fallthru
          _
        // Predicated region
        $region21: #{llama_forward.1} parent=11 // pred_check
          %p404 = pneg %p91
        $region22: #{llama_forward.1} parent=11 // pred_check_branch
          %406 = sbr.rel (%p404) target = $region24
        $region23: #{llama_forward.1} parent=11 // pred_region
          _
        $region24: #{llama_forward.1} parent=11 // pred_fallthru
          _
        // Predicated region
        $region25: #{llama_forward.1} parent=11 // pred_check
          %p407 = pneg %p112
        $region26: #{llama_forward.1} parent=11 // pred_check_branch
          %409 = sbr.rel (%p407) target = $region28
        $region27: #{llama_forward.1} parent=11 // pred_region
          _
        $region28: #{llama_forward.1} parent=11 // pred_fallthru
          _
        // Predicated region
        $region29: #{llama_forward.1} parent=11 // pred_check
          %p410 = pneg %p289
        $region30: #{llama_forward.1} parent=11 // pred_check_branch
          %412 = sbr.rel (%p410) target = $region32
        $region31: #{llama_forward.1} parent=11 // pred_region
          _
        $region32: #{llama_forward.1} parent=11 // pred_fallthru
          _
        // Predicated region
        $region33: #{llama_forward.1} parent=11 // pred_check
          %p413 = pneg %p310
        $region34: #{llama_forward.1} parent=11 // pred_check_branch
          %415 = sbr.rel (%p413) target = $region36
        $region35: #{llama_forward.1} parent=11 // pred_region
          %s417 = ssub.s32 2048, 2048
          %418 = vsyncadd [#allocation7], %s417
          %s419 = sshll.u32 [#allocation8], 4
          %s420 = int_to_ptr.vmem [resolvable:$true] %s419
          %425 = dma.hbm_to_vmem [thread:$0]  %s11, 2048, %s420, [#allocation7], 128, 128, 8
        $region36: #{llama_forward.1} parent=11 // pred_fallthru
          _
      $region12: #{llama_forward.1} parent=5 // pred_fallthru
        _
      %p426 = scmp.lt.s32.totalorder %s28, 2
      // Predicated region
      $region37: #{llama_forward.1} parent=5 // pred_check
        %p427 = pneg %p426
      $region38: #{llama_forward.1} parent=5 // pred_check_branch
        %429 = sbr.rel (%p427) target = $region40
      $region39: #{llama_forward.1} parent=5 // pred_region
        // Predicated region
        $region41: #{llama_forward.1} parent=39 // pred_check
          %p430 = pneg %p132
        $region42: #{llama_forward.1} parent=39 // pred_check_branch
          %432 = sbr.rel (%p430) target = $region44
        $region43: #{llama_forward.1} parent=39 // pred_region
          %p433 = scmp.lt.s32.totalorder %s28, 1
          %s434 = scalar_select %p433, %s28, 1
          %s435 = scalar_lea.vmem %s4, %s434
        $region44: #{llama_forward.1} parent=39 // pred_fallthru
          _
        // Predicated region
        $region45: #{llama_forward.1} parent=39 // pred_check
          %p436 = pneg %p158
        $region46: #{llama_forward.1} parent=39 // pred_check_branch
          %438 = sbr.rel (%p436) target = $region48
        $region47: #{llama_forward.1} parent=39 // pred_region
          %p439 = scmp.lt.s32.totalorder %s28, 1
          %s440 = scalar_select %p439, %s28, 1
          %s441 = scalar_lea.vmem %s5, %s440
        $region48: #{llama_forward.1} parent=39 // pred_fallthru
          _
        // Predicated region
        $region49: #{llama_forward.1} parent=39 // pred_check
          %p442 = pneg %p184
        $region50: #{llama_forward.1} parent=39 // pred_check_branch
          %444 = sbr.rel (%p442) target = $region52
        $region51: #{llama_forward.1} parent=39 // pred_region
          %s445 = sand.u32 %s174, 1
          %s446 = scalar_lea.sflag [#allocation4], %s445
          %s447 = sand.u32 %s174, 1
          %s448 = smul.addr %s447, 320
          %s449 = scalar_lea.vmem [#allocation3], %s448
          %s451 = ssub.s32 5120, 5120
          %452 = vsyncadd %s446, %s451
          %s453 = smul.addr %s28, 80
          %s454 = smul.addr %s453, 64
          %s455 = scalar_lea.hbm %s6, %s454
          %s456 = sshll.u32 %s449, 4
          %s457 = int_to_ptr.vmem [resolvable:$true] %s456
          %462 = dma.hbm_to_vmem [thread:$0]  %s455, 5120, %s457, %s446, 320, 320, 20
        $region52: #{llama_forward.1} parent=39 // pred_fallthru
          _
        // Predicated region
        $region53: #{llama_forward.1} parent=39 // pred_check
          %p463 = pneg %p210
        $region54: #{llama_forward.1} parent=39 // pred_check_branch
          %465 = sbr.rel (%p463) target = $region56
        $region55: #{llama_forward.1} parent=39 // pred_region
          %p466 = scmp.lt.s32.totalorder %s28, 1
          %s467 = scalar_select %p466, %s28, 1
          %s468 = smul.addr %s467, 16
          %s469 = smul.addr %s468, 4
          %s470 = scalar_lea.vmem %s7, %s469
        $region56: #{llama_forward.1} parent=39 // pred_fallthru
          _
        // Predicated region
        $region57: #{llama_forward.1} parent=39 // pred_check
          %p471 = pneg %p236
        $region58: #{llama_forward.1} parent=39 // pred_check_branch
          %473 = sbr.rel (%p471) target = $region60
        $region59: #{llama_forward.1} parent=39 // pred_region
          %s474 = sand.u32 %s28, 1
          %s475 = scalar_lea.sflag [#allocation7], %s474
          %s476 = sand.u32 %s226, 1
          %s477 = smul.addr %s476, 256
          %s478 = scalar_lea.vmem [#allocation6], %s477
          %s480 = ssub.s32 4096, 4096
          %481 = vsyncadd %s475, %s480
          %s482 = smul.addr %s28, 64
          %s483 = smul.addr %s482, 64
          %s484 = scalar_lea.hbm %s8, %s483
          %s485 = sshll.u32 %s478, 4
          %s486 = int_to_ptr.vmem [resolvable:$true] %s485
          %491 = dma.hbm_to_vmem [thread:$0]  %s484, 4096, %s486, %s475, 256, 256, 16
        $region60: #{llama_forward.1} parent=39 // pred_fallthru
          _
        // Predicated region
        $region61: #{llama_forward.1} parent=39 // pred_check
          %p492 = pneg %p262
        $region62: #{llama_forward.1} parent=39 // pred_check_branch
          %494 = sbr.rel (%p492) target = $region64
        $region63: #{llama_forward.1} parent=39 // pred_region
          %p495 = scmp.lt.s32.totalorder %s28, 1
          %s496 = scalar_select %p495, %s28, 1
          %s497 = smul.addr %s496, 32
          %s498 = smul.addr %s497, 4
          %s499 = scalar_lea.vmem %s9, %s498
        $region64: #{llama_forward.1} parent=39 // pred_fallthru
          _
      $region40: #{llama_forward.1} parent=5 // pred_fallthru
        _
      %p500 = scmp.le.s32.totalorder 1, %s28
      %p501 = scmp.lt.s32.totalorder %s28, 3
      %p502 = pnand %p500, %p501
      %p503 = pneg %p502
      // Predicated region
      $region65: #{llama_forward.1} parent=5 // pred_check
        _
      $region66: #{llama_forward.1} parent=5 // pred_check_branch
        %505 = sbr.rel (%p502) target = $region68
      $region67: #{llama_forward.1} parent=5 // pred_region
        %s506 = ssub.s32 %s28, 1
        %s507 = sand.u32 %s177, 1
        %s508 = scalar_lea.sflag [#allocation4], %s507
        %s509 = sand.u32 %s177, 1
        %s510 = smul.addr %s509, 320
        %s511 = scalar_lea.vmem [#allocation3], %s510
        // Predicated region
        $region69: #{llama_forward.1} parent=67 // pred_check
          %p512 = pneg %p190
        $region70: #{llama_forward.1} parent=67 // pred_check_branch
          %514 = sbr.rel (%p512) target = $region72
        $region71: #{llama_forward.1} parent=67 // pred_region
          %515 = dma.done %s508, 5120
        $region72: #{llama_forward.1} parent=67 // pred_fallthru
          _
        %s516 = sand.u32 %s33, 1
        %s517 = scalar_lea.sflag [#allocation7], %s516
        %s518 = sand.u32 %s229, 1
        %s519 = smul.addr %s518, 256
        %s520 = scalar_lea.vmem [#allocation6], %s519
        // Predicated region
        $region73: #{llama_forward.1} parent=67 // pred_check
          %p521 = pneg %p242
        $region74: #{llama_forward.1} parent=67 // pred_check_branch
          %523 = sbr.rel (%p521) target = $region76
        $region75: #{llama_forward.1} parent=67 // pred_region
          %524 = dma.done %s517, 4096
        $region76: #{llama_forward.1} parent=67 // pred_fallthru
          _
        // Predicated region
        $region77: #{llama_forward.1} parent=67 // pred_check
          %p525 = pneg %p310
        $region78: #{llama_forward.1} parent=67 // pred_check_branch
          %527 = sbr.rel (%p525) target = $region80
        $region79: #{llama_forward.1} parent=67 // pred_region
          %528 = dma.done [#allocation7], 2048
        $region80: #{llama_forward.1} parent=67 // pred_fallthru
          _
        %p529 = pneg %p49
        %p530 = pneg %p46
        %p531 = pneg %p70
        %p532 = pneg %p67
        %p533 = pneg %p91
        %p534 = pneg %p88
        %p535 = pneg %p112
        %p536 = pneg %p109
        %p537 = scmp.lt.s32.totalorder %s33, 1
        %s538 = scalar_select %p537, %s33, 1
        %s539 = scalar_lea.vmem %s4, %s538
        %p540 = pneg %p138
        %p541 = pneg %p135
        %p542 = scmp.lt.s32.totalorder %s33, 1
        %s543 = scalar_select %p542, %s33, 1
        %s544 = scalar_lea.vmem %s5, %s543
        %p545 = pneg %p164
        %p546 = pneg %p161
        %s547 = sand.u32 %s177, 1
        %s548 = scalar_lea.sflag [#allocation4], %s547
        %s549 = sand.u32 %s177, 1
        %s550 = smul.addr %s549, 320
        %s551 = scalar_lea.vmem [#allocation3], %s550
        %p552 = pneg %p190
        %p553 = pneg %p187
        %p554 = scmp.lt.s32.totalorder %s33, 1
        %s555 = scalar_select %p554, %s33, 1
        %s556 = smul.addr %s555, 16
        %s557 = smul.addr %s556, 4
        %s558 = scalar_lea.vmem %s7, %s557
        %p559 = pneg %p216
        %p560 = pneg %p213
        %s561 = sand.u32 %s33, 1
        %s562 = scalar_lea.sflag [#allocation7], %s561
        %s563 = sand.u32 %s229, 1
        %s564 = smul.addr %s563, 256
        %s565 = scalar_lea.vmem [#allocation6], %s564
        %p566 = pneg %p242
        %p567 = pneg %p239
        %p568 = scmp.lt.s32.totalorder %s33, 1
        %s569 = scalar_select %p568, %s33, 1
        %s570 = smul.addr %s569, 32
        %s571 = smul.addr %s570, 4
        %s572 = scalar_lea.vmem %s9, %s571
        %p573 = pneg %p268
        %p574 = pneg %p265
        %p575 = pneg %p289
        %p576 = pneg %p286
        %p577 = pneg %p310
        %p578 = pneg %p307
        %p579 = pneg %p331
        %p580 = pneg %p328
        %p581 = pneg %p357
        %p582 = pneg %p354
        %p583 = scmp.lt.s32.totalorder %s33, 1
        %s584 = scalar_select %p583, %s33, 1
        %s585 = smul.addr %s584, 8
        %s586 = smul.addr %s585, 8
        %s587 = scalar_lea.vmem %s13, %s586
        %p588 = pneg %p383
        %p589 = pneg %p380
        %p590 = scmp.lt.s32.totalorder %s33, 1
        %s591 = scalar_select %p590, %s33, 1
        %s592 = smul.addr %s591, 2
        %s593 = smul.addr %s592, 8
        %s594 = scalar_lea.vmem %s14, %s593
        %p595 = scmp.lt.s32.totalorder %s33, 1
        %s596 = scalar_select %p595, %s33, 1
        %s597 = scalar_lea.vmem %s4, %s596
        %p598 = scmp.lt.s32.totalorder %s33, 1
        %s599 = scalar_select %p598, %s33, 1
        %s600 = scalar_lea.vmem %s5, %s599
        %p601 = scmp.lt.s32.totalorder %s33, 1
        %s602 = scalar_select %p601, %s33, 1
        %s603 = smul.addr %s602, 16
        %s604 = smul.addr %s603, 4
        %s605 = scalar_lea.vmem %s7, %s604
        %p606 = scmp.lt.s32.totalorder %s33, 1
        %s607 = scalar_select %p606, %s33, 1
        %s608 = smul.addr %s607, 32
        %s609 = smul.addr %s608, 4
        %s610 = scalar_lea.vmem %s9, %s609
        %p611 = scmp.lt.s32.totalorder %s33, 1
        %s612 = scalar_select %p611, %s33, 1
        %s613 = smul.addr %s612, 8
        %s614 = smul.addr %s613, 8
        %s615 = scalar_lea.vmem %s13, %s614
        %p616 = scmp.lt.s32.totalorder %s33, 1
        %s617 = scalar_select %p616, %s33, 1
        %s618 = smul.addr %s617, 2
        %s619 = smul.addr %s618, 8
        %s620 = scalar_lea.vmem %s14, %s619
        %p622 = scmp.eq.s32.totalorder %s33, 0
        // Predicated region
        $region81: #{llama_forward.1} parent=67 // pred_check
          %p623 = pneg %p622
        $region82: #{llama_forward.1} parent=67 // pred_check_branch
          %625 = sbr.rel (%p623) target = $region84
        $region83: #{llama_forward.1} parent=67 // pred_region
          %v626 = vld [vmem:[%s0] sm:$0xff]
          %v627 = vld [vmem:[%s0 + $0x8] sm:$0xff]
          %628 = vst [vmem:[#allocation2] sm:$0xff] %v626
          %629 = vst [vmem:[#allocation2 + $0x8] sm:$0xff] %v627
        $region84: #{llama_forward.1} parent=67 // pred_fallthru
          _
        %v630 = vld [vmem:[#allocation2] sm:$0xff]
        %v631 = vld [vmem:[#allocation2 + $0x8] sm:$0xff]
        %v632 = vld [vmem:[%s1] sm:$0xff]
        %v633 = vld [vmem:[%s1 + $0x8] sm:$0xff]
        %v634 = vld [vmem:[%s2] sm:$0xff]
        %v635 = vld [vmem:[%s2 + $0x8] sm:$0xff]
        %v636 = vld [vmem:[%s3] sm:$0xff]
        %v637 = vld [vmem:[%s3 + $0x8] sm:$0xff]
        %v638 = vld [vmem:[%s597] sm:$0x1]
        %v639 = vmul.f32 %v630, %v630
        %v640 = vmul.f32 %v631, %v631
        %641 = vadd.xlane.f32.xlu0 %v639
        %v642 = vpop.xlane.xlu0 %641
        %643 = vadd.xlane.f32.xlu0 %v640
        %v644 = vpop.xlane.xlu0 %643
        %v645 = vrcp.pop 128.0
        %v646 = vmul.f32 %v642, %v645
        %v647 = vmul.f32 %v644, %v645
        %v648 = vadd.f32 %v646, 1e-06
        %v649 = vadd.f32 %v647, 1e-06
        %v650 = vrsqrt.pop %v648
        %v651 = vrsqrt.pop %v649
        %v652 = vmul.f32 %v630, %v650
        %v653 = vmul.f32 %v631, %v651
        %v655 = vlaneseq
        %v656 = vshrl.u32 %v655, 7
        %v657 = vsub.s32 0, %v656
        %v658 = vrot.slane %v638, %v657
        %v660 = vmul.f32 %v652, %v658
        %v661 = vmul.f32 %v653, %v658
        %v662 = vpack.c.bf16 %v661, %v660
        %v663 = vld [vmem:[%s511] sm:$0xff]
        %v664 = vld [vmem:[%s511 + $0x8] sm:$0xff]
        %v665 = vld [vmem:[%s511 + $0x10] sm:$0xf]
        %v666 = vld [vmem:[%s511 + $0x14] sm:$0xff]
        %v667 = vld [vmem:[%s511 + $0x1c] sm:$0xff]
        %v668 = vld [vmem:[%s511 + $0x24] sm:$0xf]
        %v669 = vld [vmem:[%s511 + $0x28] sm:$0xff]
        %v670 = vld [vmem:[%s511 + $0x30] sm:$0xff]
        %v671 = vld [vmem:[%s511 + $0x38] sm:$0xf]
        %v672 = vld [vmem:[%s511 + $0x3c] sm:$0xff]
        %v673 = vld [vmem:[%s511 + $0x44] sm:$0xff]
        %v674 = vld [vmem:[%s511 + $0x4c] sm:$0xf]
        %v675 = vld [vmem:[%s511 + $0x50] sm:$0xff]
        %v676 = vld [vmem:[%s511 + $0x58] sm:$0xff]
        %v677 = vld [vmem:[%s511 + $0x60] sm:$0xf]
        %v678 = vld [vmem:[%s511 + $0x64] sm:$0xff]
        %v679 = vld [vmem:[%s511 + $0x6c] sm:$0xff]
        %v680 = vld [vmem:[%s511 + $0x74] sm:$0xf]
        %v681 = vld [vmem:[%s511 + $0x78] sm:$0xff]
        %v682 = vld [vmem:[%s511 + $0x80] sm:$0xff]
        %v683 = vld [vmem:[%s511 + $0x88] sm:$0xf]
        %v684 = vld [vmem:[%s511 + $0x8c] sm:$0xff]
        %v685 = vld [vmem:[%s511 + $0x94] sm:$0xff]
        %v686 = vld [vmem:[%s511 + $0x9c] sm:$0xf]
        %v687 = vld [vmem:[%s511 + $0xa0] sm:$0xff]
        %v688 = vld [vmem:[%s511 + $0xa8] sm:$0xff]
        %v689 = vld [vmem:[%s511 + $0xb0] sm:$0xf]
        %v690 = vld [vmem:[%s511 + $0xb4] sm:$0xff]
        %v691 = vld [vmem:[%s511 + $0xbc] sm:$0xff]
        %v692 = vld [vmem:[%s511 + $0xc4] sm:$0xf]
        %v693 = vld [vmem:[%s511 + $0xc8] sm:$0xff]
        %v694 = vld [vmem:[%s511 + $0xd0] sm:$0xff]
        %v695 = vld [vmem:[%s511 + $0xd8] sm:$0xf]
        %v696 = vld [vmem:[%s511 + $0xdc] sm:$0xff]
        %v697 = vld [vmem:[%s511 + $0xe4] sm:$0xff]
        %v698 = vld [vmem:[%s511 + $0xec] sm:$0xf]
        %v699 = vld [vmem:[%s511 + $0xf0] sm:$0xff]
        %v700 = vld [vmem:[%s511 + $0xf8] sm:$0xff]
        %v701 = vld [vmem:[%s511 + $0x100] sm:$0xf]
        %v702 = vld [vmem:[%s511 + $0x104] sm:$0xff]
        %v703 = vld [vmem:[%s511 + $0x10c] sm:$0xff]
        %v704 = vld [vmem:[%s511 + $0x114] sm:$0xf]
        %v705 = vld [vmem:[%s511 + $0x118] sm:$0xff]
        %v706 = vld [vmem:[%s511 + $0x120] sm:$0xff]
        %v707 = vld [vmem:[%s511 + $0x128] sm:$0xf]
        %v708 = vld [vmem:[%s511 + $0x12c] sm:$0xff]
        %v709 = vld [vmem:[%s511 + $0x134] sm:$0xff]
        %v710 = vld [vmem:[%s511 + $0x13c] sm:$0xf]
        %v759 = vunpack.c.l.b16 %v663
        %v760 = vunpack.c.h.b16 %v663
        %v761 = vunpack.c.l.b16 %v664
        %v762 = vunpack.c.h.b16 %v664
        %v763 = vunpack.c.l.b16 %v665
        %v764 = vunpack.c.l.b16 %v666
        %v765 = vunpack.c.h.b16 %v666
        %v766 = vunpack.c.l.b16 %v667
        %v767 = vunpack.c.h.b16 %v667
        %v768 = vunpack.c.l.b16 %v668
        %v769 = vunpack.c.l.b16 %v669
        %v770 = vunpack.c.h.b16 %v669
        %v771 = vunpack.c.l.b16 %v670
        %v772 = vunpack.c.h.b16 %v670
        %v773 = vunpack.c.l.b16 %v671
        %v774 = vunpack.c.l.b16 %v672
        %v775 = vunpack.c.h.b16 %v672
        %v776 = vunpack.c.l.b16 %v673
        %v777 = vunpack.c.h.b16 %v673
        %v778 = vunpack.c.l.b16 %v674
        %v779 = vunpack.c.l.b16 %v675
        %v780 = vunpack.c.h.b16 %v675
        %v781 = vunpack.c.l.b16 %v676
        %v782 = vunpack.c.h.b16 %v676
        %v783 = vunpack.c.l.b16 %v677
        %v784 = vunpack.c.l.b16 %v678
        %v785 = vunpack.c.h.b16 %v678
        %v786 = vunpack.c.l.b16 %v679
        %v787 = vunpack.c.h.b16 %v679
        %v788 = vunpack.c.l.b16 %v680
        %v789 = vunpack.c.l.b16 %v681
        %v790 = vunpack.c.h.b16 %v681
        %v791 = vunpack.c.l.b16 %v682
        %v792 = vunpack.c.h.b16 %v682
        %v793 = vunpack.c.l.b16 %v683
        %v794 = vunpack.c.l.b16 %v684
        %v795 = vunpack.c.h.b16 %v684
        %v796 = vunpack.c.l.b16 %v685
        %v797 = vunpack.c.h.b16 %v685
        %v798 = vunpack.c.l.b16 %v686
        %v799 = vunpack.c.l.b16 %v687
        %v800 = vunpack.c.h.b16 %v687
        %v801 = vunpack.c.l.b16 %v688
        %v802 = vunpack.c.h.b16 %v688
        %v803 = vunpack.c.l.b16 %v689
        %v804 = vunpack.c.l.b16 %v690
        %v805 = vunpack.c.h.b16 %v690
        %v806 = vunpack.c.l.b16 %v691
        %v807 = vunpack.c.h.b16 %v691
        %v808 = vunpack.c.l.b16 %v692
        %v809 = vunpack.c.l.b16 %v693
        %v810 = vunpack.c.h.b16 %v693
        %v811 = vunpack.c.l.b16 %v694
        %v812 = vunpack.c.h.b16 %v694
        %v813 = vunpack.c.l.b16 %v695
        %v814 = vunpack.c.l.b16 %v696
        %v815 = vunpack.c.h.b16 %v696
        %v816 = vunpack.c.l.b16 %v697
        %v817 = vunpack.c.h.b16 %v697
        %v818 = vunpack.c.l.b16 %v698
        %v819 = vunpack.c.l.b16 %v699
        %v820 = vunpack.c.h.b16 %v699
        %v821 = vunpack.c.l.b16 %v700
        %v822 = vunpack.c.h.b16 %v700
        %v823 = vunpack.c.l.b16 %v701
        %v824 = vunpack.c.l.b16 %v702
        %v825 = vunpack.c.h.b16 %v702
        %v826 = vunpack.c.l.b16 %v703
        %v827 = vunpack.c.h.b16 %v703
        %v828 = vunpack.c.l.b16 %v704
        %v829 = vunpack.c.l.b16 %v705
        %v830 = vunpack.c.h.b16 %v705
        %v831 = vunpack.c.l.b16 %v706
        %v832 = vunpack.c.h.b16 %v706
        %v833 = vunpack.c.l.b16 %v707
        %v834 = vunpack.c.l.b16 %v708
        %v835 = vunpack.c.h.b16 %v708
        %v836 = vunpack.c.l.b16 %v709
        %v837 = vunpack.c.h.b16 %v709
        %v838 = vunpack.c.l.b16 %v710
        %v839 = vpack.c.b16 %v764, %v759
        %v840 = vpack.c.b16 %v765, %v760
        %v841 = vpack.c.b16 %v766, %v761
        %v842 = vpack.c.b16 %v767, %v762
        %v843 = vpack.c.b16 %v768, %v763
        %v844 = vpack.c.b16 %v774, %v769
        %v845 = vpack.c.b16 %v775, %v770
        %v846 = vpack.c.b16 %v776, %v771
        %v847 = vpack.c.b16 %v777, %v772
        %v848 = vpack.c.b16 %v778, %v773
        %v849 = vpack.c.b16 %v784, %v779
        %v850 = vpack.c.b16 %v785, %v780
        %v851 = vpack.c.b16 %v786, %v781
        %v852 = vpack.c.b16 %v787, %v782
        %v853 = vpack.c.b16 %v788, %v783
        %v854 = vpack.c.b16 %v794, %v789
        %v855 = vpack.c.b16 %v795, %v790
        %v856 = vpack.c.b16 %v796, %v791
        %v857 = vpack.c.b16 %v797, %v792
        %v858 = vpack.c.b16 %v798, %v793
        %v859 = vpack.c.b16 %v804, %v799
        %v860 = vpack.c.b16 %v805, %v800
        %v861 = vpack.c.b16 %v806, %v801
        %v862 = vpack.c.b16 %v807, %v802
        %v863 = vpack.c.b16 %v808, %v803
        %v864 = vpack.c.b16 %v814, %v809
        %v865 = vpack.c.b16 %v815, %v810
        %v866 = vpack.c.b16 %v816, %v811
        %v867 = vpack.c.b16 %v817, %v812
        %v868 = vpack.c.b16 %v818, %v813
        %v869 = vpack.c.b16 %v824, %v819
        %v870 = vpack.c.b16 %v825, %v820
        %v871 = vpack.c.b16 %v826, %v821
        %v872 = vpack.c.b16 %v827, %v822
        %v873 = vpack.c.b16 %v828, %v823
        %v874 = vpack.c.b16 %v834, %v829
        %v875 = vpack.c.b16 %v835, %v830
        %v876 = vpack.c.b16 %v836, %v831
        %v877 = vpack.c.b16 %v837, %v832
        %v878 = vpack.c.b16 %v838, %v833
        %919 = vmatprep.subr.bf16.mxu0 %v840
        %920 = vmatpush1.bf16.msra.mxu0 %v839
        %921 = vmatprep.subr.bf16.mxu0 %v845
        %922 = vmatpush1.bf16.msra.mxu0 %v844
        %923 = vmatprep.subr.bf16.mxu0 %v850
        %924 = vmatpush1.bf16.msra.mxu0 %v849
        %925 = vmatprep.subr.bf16.mxu0 %v855
        %926 = vmatpush1.bf16.msra.mxu0 %v854
        %927 = vmatprep.subr.bf16.mxu0 %v860
        %928 = vmatpush1.bf16.msra.mxu0 %v859
        %929 = vmatprep.subr.bf16.mxu0 %v865
        %930 = vmatpush1.bf16.msra.mxu0 %v864
        %931 = vmatprep.subr.bf16.mxu0 %v870
        %932 = vmatpush1.bf16.msra.mxu0 %v869
        %933 = vmatprep.subr.bf16.mxu0 %v875
        %934 = vmatpush1.bf16.msra.mxu0 %v874
        %935 = vmatprep.subr.bf16.mxu0 0
        %936 = vmatpush1.bf16.msra.mxu0 0
        %937 = vmatprep.subr.bf16.mxu0 0
        %938 = vmatpush1.bf16.msra.mxu0 0
        %939 = vmatprep.subr.bf16.mxu0 0
        %940 = vmatpush1.bf16.msra.mxu0 0
        %941 = vmatprep.subr.bf16.mxu0 0
        %942 = vmatpush1.bf16.msra.mxu0 0
        %943 = vmatprep.subr.bf16.mxu0 0
        %944 = vmatpush1.bf16.msra.mxu0 0
        %945 = vmatprep.subr.bf16.mxu0 0
        %946 = vmatpush1.bf16.msra.mxu0 0
        %947 = vmatprep.subr.bf16.mxu0 0
        %948 = vmatpush1.bf16.msra.mxu0 0
        %949 = vmatprep.subr.bf16.mxu0 0
        %950 = vmatpush1.bf16.msra.mxu0 0
        %951 = vmatprep.mubr.bf16.mxu0 0
        %952 = vmatmul.mubr.bf16.gmra.mrb[0].mxu0 %v662
        %v953 = vpop.f32.mrb[0].mxu0
        %v954 = vadd.f32 0.0, %v953
        %v955 = vpop.f32.mrb[0].mxu0
        %v956 = vadd.f32 0.0, %v955
        %v957 = vpop.f32.mrb[0].mxu0
        %v958 = vadd.f32 0.0, %v957
        %v959 = vpop.f32.mrb[0].mxu0
        %v960 = vadd.f32 0.0, %v959
        %961 = vdwg.mxu0
        %962 = vmatprep.subr.bf16.mxu0 %v842
        %963 = vmatpush1.bf16.msra.mxu0 %v841
        %964 = vmatprep.subr.bf16.mxu0 %v847
        %965 = vmatpush1.bf16.msra.mxu0 %v846
        %966 = vmatprep.subr.bf16.mxu0 %v852
        %967 = vmatpush1.bf16.msra.mxu0 %v851
        %968 = vmatprep.subr.bf16.mxu0 %v857
        %969 = vmatpush1.bf16.msra.mxu0 %v856
        %970 = vmatprep.subr.bf16.mxu0 %v862
        %971 = vmatpush1.bf16.msra.mxu0 %v861
        %972 = vmatprep.subr.bf16.mxu0 %v867
        %973 = vmatpush1.bf16.msra.mxu0 %v866
        %974 = vmatprep.subr.bf16.mxu0 %v872
        %975 = vmatpush1.bf16.msra.mxu0 %v871
        %976 = vmatprep.subr.bf16.mxu0 %v877
        %977 = vmatpush1.bf16.msra.mxu0 %v876
        %978 = vmatprep.subr.bf16.mxu0 0
        %979 = vmatpush1.bf16.msra.mxu0 0
        %980 = vmatprep.subr.bf16.mxu0 0
        %981 = vmatpush1.bf16.msra.mxu0 0
        %982 = vmatprep.subr.bf16.mxu0 0
        %983 = vmatpush1.bf16.msra.mxu0 0
        %984 = vmatprep.subr.bf16.mxu0 0
        %985 = vmatpush1.bf16.msra.mxu0 0
        %986 = vmatprep.subr.bf16.mxu0 0
        %987 = vmatpush1.bf16.msra.mxu0 0
        %988 = vmatprep.subr.bf16.mxu0 0
        %989 = vmatpush1.bf16.msra.mxu0 0
        %990 = vmatprep.subr.bf16.mxu0 0
        %991 = vmatpush1.bf16.msra.mxu0 0
        %992 = vmatprep.subr.bf16.mxu0 0
        %993 = vmatpush1.bf16.msra.mxu0 0
        %994 = vmatprep.mubr.bf16.mxu0 0
        %995 = vmatmul.mubr.bf16.gmra.mrb[0].mxu0 %v662
        %v996 = vpop.f32.mrb[0].mxu0
        %v997 = vadd.f32 0.0, %v996
        %v998 = vpop.f32.mrb[0].mxu0
        %v999 = vadd.f32 0.0, %v998
        %v1000 = vpop.f32.mrb[0].mxu0
        %v1001 = vadd.f32 0.0, %v1000
        %v1002 = vpop.f32.mrb[0].mxu0
        %v1003 = vadd.f32 0.0, %v1002
        %1004 = vdwg.mxu0
        %1005 = vmatprep.subr.bf16.mxu0 0
        %1006 = vmatpush1.bf16.msra.mxu0 %v843
        %1007 = vmatprep.subr.bf16.mxu0 0
        %1008 = vmatpush1.bf16.msra.mxu0 %v848
        %1009 = vmatprep.subr.bf16.mxu0 0
        %1010 = vmatpush1.bf16.msra.mxu0 %v853
        %1011 = vmatprep.subr.bf16.mxu0 0
        %1012 = vmatpush1.bf16.msra.mxu0 %v858
        %1013 = vmatprep.subr.bf16.mxu0 0
        %1014 = vmatpush1.bf16.msra.mxu0 %v863
        %1015 = vmatprep.subr.bf16.mxu0 0
        %1016 = vmatpush1.bf16.msra.mxu0 %v868
        %1017 = vmatprep.subr.bf16.mxu0 0
        %1018 = vmatpush1.bf16.msra.mxu0 %v873
        %1019 = vmatprep.subr.bf16.mxu0 0
        %1020 = vmatpush1.bf16.msra.mxu0 %v878
        %1021 = vmatprep.subr.bf16.mxu0 0
        %1022 = vmatpush1.bf16.msra.mxu0 0
        %1023 = vmatprep.subr.bf16.mxu0 0
        %1024 = vmatpush1.bf16.msra.mxu0 0
        %1025 = vmatprep.subr.bf16.mxu0 0
        %1026 = vmatpush1.bf16.msra.mxu0 0
        %1027 = vmatprep.subr.bf16.mxu0 0
        %1028 = vmatpush1.bf16.msra.mxu0 0
        %1029 = vmatprep.subr.bf16.mxu0 0
        %1030 = vmatpush1.bf16.msra.mxu0 0
        %1031 = vmatprep.subr.bf16.mxu0 0
        %1032 = vmatpush1.bf16.msra.mxu0 0
        %1033 = vmatprep.subr.bf16.mxu0 0
        %1034 = vmatpush1.bf16.msra.mxu0 0
        %1035 = vmatprep.subr.bf16.mxu0 0
        %1036 = vmatpush1.bf16.msra.mxu0 0
        %1037 = vmatprep.mubr.bf16.mxu0 0
        %1038 = vmatmul.mubr.bf16.gmra.mrb[0].mxu0 %v662
        %v1039 = vpop.f32.mrb[0].mxu0
        %v1040 = vadd.f32 0.0, %v1039
        %v1041 = vpop.f32.mrb[0].mxu0
        %v1042 = vpop.f32.mrb[0].mxu0
        %v1043 = vadd.f32 0.0, %v1042
        %v1044 = vpop.f32.mrb[0].mxu0
        %1045 = vdwg.mxu0
        %v1046 = vmul.f32 %v954, %v632
        %v1047 = vmul.f32 %v958, %v633
        %v1048 = vmul.f32 %v956, %v634
        %v1049 = vmul.f32 %v960, %v635
        %v1050 = vadd.f32 %v1046, %v1048
        %v1051 = vadd.f32 %v1047, %v1049
        %v1052 = vpack.c.bf16 %v1051, %v1050
        %v1053 = vmul.f32 %v997, %v632
        %v1054 = vmul.f32 %v1001, %v633
        %v1055 = vmul.f32 %v999, %v634
        %v1056 = vmul.f32 %v1003, %v635
        %v1057 = vadd.f32 %v1053, %v1055
        %v1058 = vadd.f32 %v1054, %v1056
        %v1059 = vpack.c.bf16 %v1058, %v1057
        %v1060 = vpack.c.bf16 %v1043, %v1040
        %vm1061 = vcmask 261120
        %v1063 = vsel %vm1061, %v1052, 0
        %v1066 = vsel %vm1061, %v1059, 0
        %1068 = vmatprep.subr.bf16.mxu0 0
        %1069 = vmatpush1.bf16.xpose.msra.mxu0 %v1066
        %1070 = vmatprep.subr.bf16.mxu0 0
        %1071 = vmatpush1.bf16.xpose.msra.mxu0 0
        %1072 = vmatprep.subr.bf16.mxu0 0
        %1073 = vmatpush1.bf16.xpose.msra.mxu0 0
        %1074 = vmatprep.subr.bf16.mxu0 0
        %1075 = vmatpush1.bf16.xpose.msra.mxu0 0
        %1076 = vmatprep.subr.bf16.mxu0 0
        %1077 = vmatpush1.bf16.xpose.msra.mxu0 0
        %1078 = vmatprep.subr.bf16.mxu0 0
        %1079 = vmatpush1.bf16.xpose.msra.mxu0 0
        %1080 = vmatprep.subr.bf16.mxu0 0
        %1081 = vmatpush1.bf16.xpose.msra.mxu0 0
        %1082 = vmatprep.subr.bf16.mxu0 0
        %1083 = vmatpush1.bf16.xpose.msra.mxu0 0
        %1084 = vmatprep.subr.bf16.mxu0 0
        %1085 = vmatpush1.bf16.xpose.msra.mxu0 0
        %1086 = vmatprep.subr.bf16.mxu0 0
        %1087 = vmatpush1.bf16.xpose.msra.mxu0 0
        %1088 = vmatprep.subr.bf16.mxu0 0
        %1089 = vmatpush1.bf16.xpose.msra.mxu0 0
        %1090 = vmatprep.subr.bf16.mxu0 0
        %1091 = vmatpush1.bf16.xpose.msra.mxu0 0
        %1092 = vmatprep.subr.bf16.mxu0 0
        %1093 = vmatpush1.bf16.xpose.msra.mxu0 0
        %1094 = vmatprep.subr.bf16.mxu0 0
        %1095 = vmatpush1.bf16.xpose.msra.mxu0 0
        %1096 = vmatprep.subr.bf16.mxu0 0
        %1097 = vmatpush1.bf16.xpose.msra.mxu0 0
        %1098 = vmatprep.subr.bf16.mxu0 0
        %1099 = vmatpush1.bf16.xpose.msra.mxu0 0
        %1100 = vmatprep.mubr.bf16.mxu0 0
        %1101 = vmatmul.mubr.bf16.gmra.mrb[0].mxu0 %v1063
        %v1102 = vpop.f32.mrb[0].mxu0
        %v1103 = vadd.f32 0.0, %v1102
        %v1104 = vpop.f32.mrb[0].mxu0
        %v1105 = vpop.f32.mrb[0].mxu0
        %v1106 = vadd.f32 0.0, %v1105
        %v1107 = vpop.f32.mrb[0].mxu0
        %1108 = vdwg.mxu0
        %v1109 = vmul.f32 %v1103, 0.17677669
        %v1110 = vmul.f32 %v1106, 0.17677669
        %v1111 = vadd.f32 %v1109, %v636
        %v1112 = vadd.f32 %v1110, %v637
        %vm1113 = vcmask 130048
        %v1114 = vsel %vm1113, %v1111, -inf
        %1115 = vmax.xlane.f32.xlu0 %v1114
        %v1116 = vpop.xlane.xlu0 %1115
        %v1117 = vsel %vm1113, %v1112, -inf
        %1118 = vmax.xlane.f32.xlu0 %v1117
        %v1119 = vpop.xlane.xlu0 %1118
        %v1120 = vsub.f32 %v1111, %v1116
        %v1121 = vsub.f32 %v1112, %v1119
        %v1122 = vmul.f32 %v1120, 1.442695
        %v1123 = vpow.pop %v1122
        %v1124 = vmul.f32 %v1121, 1.442695
        %v1125 = vpow.pop %v1124
        %v1126 = vsel %vm1113, %v1123, 0.0
        %1127 = vadd.xlane.f32.xlu0 %v1126
        %v1128 = vpop.xlane.xlu0 %1127
        %v1129 = vsel %vm1113, %v1125, 0.0
        %1130 = vadd.xlane.f32.xlu0 %v1129
        %v1131 = vpop.xlane.xlu0 %1130
        %v1132 = vrcp.pop %v1128
        %v1133 = vmul.f32 %v1123, %v1132
        %v1134 = vrcp.pop %v1131
        %v1135 = vmul.f32 %v1125, %v1134
        %1136 = vst.msk [vmem:[%s615] sm:$0xff] %vm1113, %v1133
        %1137 = vst.msk [vmem:[%s615 + $0x8] sm:$0xff] %vm1113, %v1135
        %v1138 = vpack.c.bf16 %v1135, %v1133
        %v1140 = vsel %vm1113, %v1138, 0
        %1142 = vmatprep.subr.bf16.mxu0 0
        %1143 = vmatpush1.bf16.msra.mxu0 %v1060
        %1144 = vmatprep.subr.bf16.mxu0 0
        %1145 = vmatpush1.bf16.msra.mxu0 0
        %1146 = vmatprep.subr.bf16.mxu0 0
        %1147 = vmatpush1.bf16.msra.mxu0 0
        %1148 = vmatprep.subr.bf16.mxu0 0
        %1149 = vmatpush1.bf16.msra.mxu0 0
        %1150 = vmatprep.subr.bf16.mxu0 0
        %1151 = vmatpush1.bf16.msra.mxu0 0
        %1152 = vmatprep.subr.bf16.mxu0 0
        %1153 = vmatpush1.bf16.msra.mxu0 0
        %1154 = vmatprep.subr.bf16.mxu0 0
        %1155 = vmatpush1.bf16.msra.mxu0 0
        %1156 = vmatprep.subr.bf16.mxu0 0
        %1157 = vmatpush1.bf16.msra.mxu0 0
        %1158 = vmatprep.subr.bf16.mxu0 0
        %1159 = vmatpush1.bf16.msra.mxu0 0
        %1160 = vmatprep.subr.bf16.mxu0 0
        %1161 = vmatpush1.bf16.msra.mxu0 0
        %1162 = vmatprep.subr.bf16.mxu0 0
        %1163 = vmatpush1.bf16.msra.mxu0 0
        %1164 = vmatprep.subr.bf16.mxu0 0
        %1165 = vmatpush1.bf16.msra.mxu0 0
        %1166 = vmatprep.subr.bf16.mxu0 0
        %1167 = vmatpush1.bf16.msra.mxu0 0
        %1168 = vmatprep.subr.bf16.mxu0 0
        %1169 = vmatpush1.bf16.msra.mxu0 0
        %1170 = vmatprep.subr.bf16.mxu0 0
        %1171 = vmatpush1.bf16.msra.mxu0 0
        %1172 = vmatprep.subr.bf16.mxu0 0
        %1173 = vmatpush1.bf16.msra.mxu0 0
        %1174 = vmatprep.mubr.bf16.mxu0 0
        %1175 = vmatmul.mubr.bf16.gmra.mrb[0].mxu0 %v1140
        %v1176 = vpop.f32.mrb[0].mxu0
        %v1177 = vadd.f32 0.0, %v1176
        %v1178 = vpop.f32.mrb[0].mxu0
        %v1179 = vpop.f32.mrb[0].mxu0
        %v1180 = vadd.f32 0.0, %v1179
        %v1181 = vpop.f32.mrb[0].mxu0
        %1182 = vdwg.mxu0
        %v1183 = vpack.c.bf16 %v1180, %v1177
        %v1184 = vld [vmem:[%s605] sm:$0xf]
        %v1185 = vld [vmem:[%s605 + $0x4] sm:$0xf]
        %v1186 = vld [vmem:[%s605 + $0x8] sm:$0xf]
        %v1187 = vld [vmem:[%s605 + $0xc] sm:$0xf]
        %1189 = vrot.lane.b32.xlu0 %v1052, 96
        %v1190 = vpop.permute.xlu0 %1189
        %1192 = vrot.lane.b32.xlu0 %v1059, 96
        %v1193 = vpop.permute.xlu0 %1192
        %v1195 = vsel %vm1061, %v1190, 0
        %v1198 = vsel %vm1061, %v1193, 0
        %1200 = vmatprep.subr.bf16.mxu0 0
        %1201 = vmatpush1.bf16.xpose.msra.mxu0 %v1198
        %1202 = vmatprep.subr.bf16.mxu0 0
        %1203 = vmatpush1.bf16.xpose.msra.mxu0 0
        %1204 = vmatprep.subr.bf16.mxu0 0
        %1205 = vmatpush1.bf16.xpose.msra.mxu0 0
        %1206 = vmatprep.subr.bf16.mxu0 0
        %1207 = vmatpush1.bf16.xpose.msra.mxu0 0
        %1208 = vmatprep.subr.bf16.mxu0 0
        %1209 = vmatpush1.bf16.xpose.msra.mxu0 0
        %1210 = vmatprep.subr.bf16.mxu0 0
        %1211 = vmatpush1.bf16.xpose.msra.mxu0 0
        %1212 = vmatprep.subr.bf16.mxu0 0
        %1213 = vmatpush1.bf16.xpose.msra.mxu0 0
        %1214 = vmatprep.subr.bf16.mxu0 0
        %1215 = vmatpush1.bf16.xpose.msra.mxu0 0
        %1216 = vmatprep.subr.bf16.mxu0 0
        %1217 = vmatpush1.bf16.xpose.msra.mxu0 0
        %1218 = vmatprep.subr.bf16.mxu0 0
        %1219 = vmatpush1.bf16.xpose.msra.mxu0 0
        %1220 = vmatprep.subr.bf16.mxu0 0
        %1221 = vmatpush1.bf16.xpose.msra.mxu0 0
        %1222 = vmatprep.subr.bf16.mxu0 0
        %1223 = vmatpush1.bf16.xpose.msra.mxu0 0
        %1224 = vmatprep.subr.bf16.mxu0 0
        %1225 = vmatpush1.bf16.xpose.msra.mxu0 0
        %1226 = vmatprep.subr.bf16.mxu0 0
        %1227 = vmatpush1.bf16.xpose.msra.mxu0 0
        %1228 = vmatprep.subr.bf16.mxu0 0
        %1229 = vmatpush1.bf16.xpose.msra.mxu0 0
        %1230 = vmatprep.subr.bf16.mxu0 0
        %1231 = vmatpush1.bf16.xpose.msra.mxu0 0
        %1232 = vmatprep.mubr.bf16.mxu0 0
        %1233 = vmatmul.mubr.bf16.gmra.mrb[0].mxu0 %v1195
        %v1234 = vpop.f32.mrb[0].mxu0
        %v1235 = vadd.f32 0.0, %v1234
        %v1236 = vpop.f32.mrb[0].mxu0
        %v1237 = vpop.f32.mrb[0].mxu0
        %v1238 = vadd.f32 0.0, %v1237
        %v1239 = vpop.f32.mrb[0].mxu0
        %1240 = vdwg.mxu0
        %v1241 = vmul.f32 %v1235, 0.17677669
        %v1242 = vmul.f32 %v1238, 0.17677669
        %v1243 = vadd.f32 %v1241, %v636
        %v1244 = vadd.f32 %v1242, %v637
        %v1245 = vsel %vm1113, %v1243, -inf
        %1246 = vmax.xlane.f32.xlu0 %v1245
        %v1247 = vpop.xlane.xlu0 %1246
        %v1248 = vsel %vm1113, %v1244, -inf
        %1249 = vmax.xlane.f32.xlu0 %v1248
        %v1250 = vpop.xlane.xlu0 %1249
        %v1251 = vsub.f32 %v1243, %v1247
        %v1252 = vsub.f32 %v1244, %v1250
        %v1253 = vmul.f32 %v1251, 1.442695
        %v1254 = vpow.pop %v1253
        %v1255 = vmul.f32 %v1252, 1.442695
        %v1256 = vpow.pop %v1255
        %v1257 = vsel %vm1113, %v1254, 0.0
        %1258 = vadd.xlane.f32.xlu0 %v1257
        %v1259 = vpop.xlane.xlu0 %1258
        %v1260 = vsel %vm1113, %v1256, 0.0
        %1261 = vadd.xlane.f32.xlu0 %v1260
        %v1262 = vpop.xlane.xlu0 %1261
        %v1263 = vrcp.pop %v1259
        %v1264 = vmul.f32 %v1254, %v1263
        %v1265 = vrcp.pop %v1262
        %v1266 = vmul.f32 %v1256, %v1265
        %s1267 = scalar_lea.vmem %s615, 16
        %1268 = vst.msk [vmem:[%s1267] sm:$0xff] %vm1113, %v1264
        %1269 = vst.msk [vmem:[%s1267 + $0x8] sm:$0xff] %vm1113, %v1266
        %v1270 = vpack.c.bf16 %v1266, %v1264
        %1272 = vrot.lane.b32.xlu0 %v1060, 96
        %v1273 = vpop.permute.xlu0 %1272
        %v1276 = vsel %vm1113, %v1270, 0
        %1278 = vmatprep.subr.bf16.mxu0 0
        %1279 = vmatpush1.bf16.msra.mxu0 %v1273
        %1280 = vmatprep.subr.bf16.mxu0 0
        %1281 = vmatpush1.bf16.msra.mxu0 0
        %1282 = vmatprep.subr.bf16.mxu0 0
        %1283 = vmatpush1.bf16.msra.mxu0 0
        %1284 = vmatprep.subr.bf16.mxu0 0
        %1285 = vmatpush1.bf16.msra.mxu0 0
        %1286 = vmatprep.subr.bf16.mxu0 0
        %1287 = vmatpush1.bf16.msra.mxu0 0
        %1288 = vmatprep.subr.bf16.mxu0 0
        %1289 = vmatpush1.bf16.msra.mxu0 0
        %1290 = vmatprep.subr.bf16.mxu0 0
        %1291 = vmatpush1.bf16.msra.mxu0 0
        %1292 = vmatprep.subr.bf16.mxu0 0
        %1293 = vmatpush1.bf16.msra.mxu0 0
        %1294 = vmatprep.subr.bf16.mxu0 0
        %1295 = vmatpush1.bf16.msra.mxu0 0
        %1296 = vmatprep.subr.bf16.mxu0 0
        %1297 = vmatpush1.bf16.msra.mxu0 0
        %1298 = vmatprep.subr.bf16.mxu0 0
        %1299 = vmatpush1.bf16.msra.mxu0 0
        %1300 = vmatprep.subr.bf16.mxu0 0
        %1301 = vmatpush1.bf16.msra.mxu0 0
        %1302 = vmatprep.subr.bf16.mxu0 0
        %1303 = vmatpush1.bf16.msra.mxu0 0
        %1304 = vmatprep.subr.bf16.mxu0 0
        %1305 = vmatpush1.bf16.msra.mxu0 0
        %1306 = vmatprep.subr.bf16.mxu0 0
        %1307 = vmatpush1.bf16.msra.mxu0 0
        %1308 = vmatprep.subr.bf16.mxu0 0
        %1309 = vmatpush1.bf16.msra.mxu0 0
        %1310 = vmatprep.mubr.bf16.mxu0 0
        %1311 = vmatmul.mubr.bf16.gmra.mrb[0].mxu0 %v1276
        %v1312 = vpop.f32.mrb[0].mxu0
        %v1313 = vadd.f32 0.0, %v1312
        %v1314 = vpop.f32.mrb[0].mxu0
        %v1315 = vpop.f32.mrb[0].mxu0
        %v1316 = vadd.f32 0.0, %v1315
        %v1317 = vpop.f32.mrb[0].mxu0
        %1318 = vdwg.mxu0
        %v1319 = vpack.c.bf16 %v1316, %v1313
        %v1320 = vld [vmem:[%s605 + $0x10] sm:$0xf]
        %v1321 = vld [vmem:[%s605 + $0x14] sm:$0xf]
        %v1322 = vld [vmem:[%s605 + $0x18] sm:$0xf]
        %v1323 = vld [vmem:[%s605 + $0x1c] sm:$0xf]
        %v1328 = vunpack.c.l.b16 %v1320
        %v1329 = vunpack.c.l.b16 %v1321
        %v1330 = vunpack.c.l.b16 %v1322
        %v1331 = vunpack.c.l.b16 %v1323
        %v1332 = vpack.c.b16 %v1329, %v1328
        %v1333 = vpack.c.b16 %v1331, %v1330
        %v1337 = vsel %vm1061, %v1319, 0
        %1339 = vmatprep.subr.bf16.mxu0 0
        %1340 = vmatpush1.bf16.msra.mxu0 %v1332
        %1341 = vmatprep.subr.bf16.mxu0 0
        %1342 = vmatpush1.bf16.msra.mxu0 %v1333
        %1343 = vmatprep.subr.bf16.mxu0 0
        %1344 = vmatpush1.bf16.msra.mxu0 0
        %1345 = vmatprep.subr.bf16.mxu0 0
        %1346 = vmatpush1.bf16.msra.mxu0 0
        %1347 = vmatprep.subr.bf16.mxu0 0
        %1348 = vmatpush1.bf16.msra.mxu0 0
        %1349 = vmatprep.subr.bf16.mxu0 0
        %1350 = vmatpush1.bf16.msra.mxu0 0
        %1351 = vmatprep.subr.bf16.mxu0 0
        %1352 = vmatpush1.bf16.msra.mxu0 0
        %1353 = vmatprep.subr.bf16.mxu0 0
        %1354 = vmatpush1.bf16.msra.mxu0 0
        %1355 = vmatprep.subr.bf16.mxu0 0
        %1356 = vmatpush1.bf16.msra.mxu0 0
        %1357 = vmatprep.subr.bf16.mxu0 0
        %1358 = vmatpush1.bf16.msra.mxu0 0
        %1359 = vmatprep.subr.bf16.mxu0 0
        %1360 = vmatpush1.bf16.msra.mxu0 0
        %1361 = vmatprep.subr.bf16.mxu0 0
        %1362 = vmatpush1.bf16.msra.mxu0 0
        %1363 = vmatprep.subr.bf16.mxu0 0
        %1364 = vmatpush1.bf16.msra.mxu0 0
        %1365 = vmatprep.subr.bf16.mxu0 0
        %1366 = vmatpush1.bf16.msra.mxu0 0
        %1367 = vmatprep.subr.bf16.mxu0 0
        %1368 = vmatpush1.bf16.msra.mxu0 0
        %1369 = vmatprep.subr.bf16.mxu0 0
        %1370 = vmatpush1.bf16.msra.mxu0 0
        %1371 = vmatprep.mubr.bf16.mxu0 0
        %1372 = vmatmul.mubr.bf16.gmra.mrb[0].mxu0 %v1337
        %v1373 = vpop.f32.mrb[0].mxu0
        %v1374 = vadd.f32 0.0, %v1373
        %v1375 = vpop.f32.mrb[0].mxu0
        %v1376 = vpop.f32.mrb[0].mxu0
        %v1377 = vadd.f32 0.0, %v1376
        %v1378 = vpop.f32.mrb[0].mxu0
        %1379 = vdwg.mxu0
        %v1384 = vunpack.c.l.b16 %v1184
        %v1385 = vunpack.c.l.b16 %v1185
        %v1386 = vunpack.c.l.b16 %v1186
        %v1387 = vunpack.c.l.b16 %v1187
        %v1388 = vpack.c.b16 %v1385, %v1384
        %v1389 = vpack.c.b16 %v1387, %v1386
        %v1393 = vsel %vm1061, %v1183, 0
        %1395 = vmatprep.subr.bf16.mxu0 0
        %1396 = vmatpush1.bf16.msra.mxu0 %v1388
        %1397 = vmatprep.subr.bf16.mxu0 0
        %1398 = vmatpush1.bf16.msra.mxu0 %v1389
        %1399 = vmatprep.subr.bf16.mxu0 0
        %1400 = vmatpush1.bf16.msra.mxu0 0
        %1401 = vmatprep.subr.bf16.mxu0 0
        %1402 = vmatpush1.bf16.msra.mxu0 0
        %1403 = vmatprep.subr.bf16.mxu0 0
        %1404 = vmatpush1.bf16.msra.mxu0 0
        %1405 = vmatprep.subr.bf16.mxu0 0
        %1406 = vmatpush1.bf16.msra.mxu0 0
        %1407 = vmatprep.subr.bf16.mxu0 0
        %1408 = vmatpush1.bf16.msra.mxu0 0
        %1409 = vmatprep.subr.bf16.mxu0 0
        %1410 = vmatpush1.bf16.msra.mxu0 0
        %1411 = vmatprep.subr.bf16.mxu0 0
        %1412 = vmatpush1.bf16.msra.mxu0 0
        %1413 = vmatprep.subr.bf16.mxu0 0
        %1414 = vmatpush1.bf16.msra.mxu0 0
        %1415 = vmatprep.subr.bf16.mxu0 0
        %1416 = vmatpush1.bf16.msra.mxu0 0
        %1417 = vmatprep.subr.bf16.mxu0 0
        %1418 = vmatpush1.bf16.msra.mxu0 0
        %1419 = vmatprep.subr.bf16.mxu0 0
        %1420 = vmatpush1.bf16.msra.mxu0 0
        %1421 = vmatprep.subr.bf16.mxu0 0
        %1422 = vmatpush1.bf16.msra.mxu0 0
        %1423 = vmatprep.subr.bf16.mxu0 0
        %1424 = vmatpush1.bf16.msra.mxu0 0
        %1425 = vmatprep.subr.bf16.mxu0 0
        %1426 = vmatpush1.bf16.msra.mxu0 0
        %1427 = vmatprep.mubr.bf16.mxu0 0
        %1428 = vmatmul.mubr.bf16.gmra.mrb[0].mxu0 %v1393
        %v1429 = vpop.f32.mrb[0].mxu0
        %v1430 = vadd.f32 %v1374, %v1429
        %v1431 = vpop.f32.mrb[0].mxu0
        %v1432 = vpop.f32.mrb[0].mxu0
        %v1433 = vadd.f32 %v1377, %v1432
        %v1434 = vpop.f32.mrb[0].mxu0
        %1435 = vdwg.mxu0
        %1436 = vrot.lane.b32.xlu0 %v1052, 64
        %v1437 = vpop.permute.xlu0 %1436
        %1438 = vrot.lane.b32.xlu0 %v1059, 64
        %v1439 = vpop.permute.xlu0 %1438
        %v1441 = vsel %vm1061, %v1437, 0
        %v1444 = vsel %vm1061, %v1439, 0
        %1446 = vmatprep.subr.bf16.mxu0 0
        %1447 = vmatpush1.bf16.xpose.msra.mxu0 %v1444
        %1448 = vmatprep.subr.bf16.mxu0 0
        %1449 = vmatpush1.bf16.xpose.msra.mxu0 0
        %1450 = vmatprep.subr.bf16.mxu0 0
        %1451 = vmatpush1.bf16.xpose.msra.mxu0 0
        %1452 = vmatprep.subr.bf16.mxu0 0
        %1453 = vmatpush1.bf16.xpose.msra.mxu0 0
        %1454 = vmatprep.subr.bf16.mxu0 0
        %1455 = vmatpush1.bf16.xpose.msra.mxu0 0
        %1456 = vmatprep.subr.bf16.mxu0 0
        %1457 = vmatpush1.bf16.xpose.msra.mxu0 0
        %1458 = vmatprep.subr.bf16.mxu0 0
        %1459 = vmatpush1.bf16.xpose.msra.mxu0 0
        %1460 = vmatprep.subr.bf16.mxu0 0
        %1461 = vmatpush1.bf16.xpose.msra.mxu0 0
        %1462 = vmatprep.subr.bf16.mxu0 0
        %1463 = vmatpush1.bf16.xpose.msra.mxu0 0
        %1464 = vmatprep.subr.bf16.mxu0 0
        %1465 = vmatpush1.bf16.xpose.msra.mxu0 0
        %1466 = vmatprep.subr.bf16.mxu0 0
        %1467 = vmatpush1.bf16.xpose.msra.mxu0 0
        %1468 = vmatprep.subr.bf16.mxu0 0
        %1469 = vmatpush1.bf16.xpose.msra.mxu0 0
        %1470 = vmatprep.subr.bf16.mxu0 0
        %1471 = vmatpush1.bf16.xpose.msra.mxu0 0
        %1472 = vmatprep.subr.bf16.mxu0 0
        %1473 = vmatpush1.bf16.xpose.msra.mxu0 0
        %1474 = vmatprep.subr.bf16.mxu0 0
        %1475 = vmatpush1.bf16.xpose.msra.mxu0 0
        %1476 = vmatprep.subr.bf16.mxu0 0
        %1477 = vmatpush1.bf16.xpose.msra.mxu0 0
        %1478 = vmatprep.mubr.bf16.mxu0 0
        %1479 = vmatmul.mubr.bf16.gmra.mrb[0].mxu0 %v1441
        %v1480 = vpop.f32.mrb[0].mxu0
        %v1481 = vadd.f32 0.0, %v1480
        %v1482 = vpop.f32.mrb[0].mxu0
        %v1483 = vpop.f32.mrb[0].mxu0
        %v1484 = vadd.f32 0.0, %v1483
        %v1485 = vpop.f32.mrb[0].mxu0
        %1486 = vdwg.mxu0
        %v1487 = vmul.f32 %v1481, 0.17677669
        %v1488 = vmul.f32 %v1484, 0.17677669
        %v1489 = vadd.f32 %v1487, %v636
        %v1490 = vadd.f32 %v1488, %v637
        %v1491 = vsel %vm1113, %v1489, -inf
        %1492 = vmax.xlane.f32.xlu0 %v1491
        %v1493 = vpop.xlane.xlu0 %1492
        %v1494 = vsel %vm1113, %v1490, -inf
        %1495 = vmax.xlane.f32.xlu0 %v1494
        %v1496 = vpop.xlane.xlu0 %1495
        %v1497 = vsub.f32 %v1489, %v1493
        %v1498 = vsub.f32 %v1490, %v1496
        %v1499 = vmul.f32 %v1497, 1.442695
        %v1500 = vpow.pop %v1499
        %v1501 = vmul.f32 %v1498, 1.442695
        %v1502 = vpow.pop %v1501
        %v1503 = vsel %vm1113, %v1500, 0.0
        %1504 = vadd.xlane.f32.xlu0 %v1503
        %v1505 = vpop.xlane.xlu0 %1504
        %v1506 = vsel %vm1113, %v1502, 0.0
        %1507 = vadd.xlane.f32.xlu0 %v1506
        %v1508 = vpop.xlane.xlu0 %1507
        %v1509 = vrcp.pop %v1505
        %v1510 = vmul.f32 %v1500, %v1509
        %v1511 = vrcp.pop %v1508
        %v1512 = vmul.f32 %v1502, %v1511
        %s1513 = scalar_lea.vmem %s615, 32
        %1514 = vst.msk [vmem:[%s1513] sm:$0xff] %vm1113, %v1510
        %1515 = vst.msk [vmem:[%s1513 + $0x8] sm:$0xff] %vm1113, %v1512
        %v1516 = vpack.c.bf16 %v1512, %v1510
        %1517 = vrot.lane.b32.xlu0 %v1060, 64
        %v1518 = vpop.permute.xlu0 %1517
        %v1521 = vsel %vm1113, %v1516, 0
        %1523 = vmatprep.subr.bf16.mxu0 0
        %1524 = vmatpush1.bf16.msra.mxu0 %v1518
        %1525 = vmatprep.subr.bf16.mxu0 0
        %1526 = vmatpush1.bf16.msra.mxu0 0
        %1527 = vmatprep.subr.bf16.mxu0 0
        %1528 = vmatpush1.bf16.msra.mxu0 0
        %1529 = vmatprep.subr.bf16.mxu0 0
        %1530 = vmatpush1.bf16.msra.mxu0 0
        %1531 = vmatprep.subr.bf16.mxu0 0
        %1532 = vmatpush1.bf16.msra.mxu0 0
        %1533 = vmatprep.subr.bf16.mxu0 0
        %1534 = vmatpush1.bf16.msra.mxu0 0
        %1535 = vmatprep.subr.bf16.mxu0 0
        %1536 = vmatpush1.bf16.msra.mxu0 0
        %1537 = vmatprep.subr.bf16.mxu0 0
        %1538 = vmatpush1.bf16.msra.mxu0 0
        %1539 = vmatprep.subr.bf16.mxu0 0
        %1540 = vmatpush1.bf16.msra.mxu0 0
        %1541 = vmatprep.subr.bf16.mxu0 0
        %1542 = vmatpush1.bf16.msra.mxu0 0
        %1543 = vmatprep.subr.bf16.mxu0 0
        %1544 = vmatpush1.bf16.msra.mxu0 0
        %1545 = vmatprep.subr.bf16.mxu0 0
        %1546 = vmatpush1.bf16.msra.mxu0 0
        %1547 = vmatprep.subr.bf16.mxu0 0
        %1548 = vmatpush1.bf16.msra.mxu0 0
        %1549 = vmatprep.subr.bf16.mxu0 0
        %1550 = vmatpush1.bf16.msra.mxu0 0
        %1551 = vmatprep.subr.bf16.mxu0 0
        %1552 = vmatpush1.bf16.msra.mxu0 0
        %1553 = vmatprep.subr.bf16.mxu0 0
        %1554 = vmatpush1.bf16.msra.mxu0 0
        %1555 = vmatprep.mubr.bf16.mxu0 0
        %1556 = vmatmul.mubr.bf16.gmra.mrb[0].mxu0 %v1521
        %v1557 = vpop.f32.mrb[0].mxu0
        %v1558 = vadd.f32 0.0, %v1557
        %v1559 = vpop.f32.mrb[0].mxu0
        %v1560 = vpop.f32.mrb[0].mxu0
        %v1561 = vadd.f32 0.0, %v1560
        %v1562 = vpop.f32.mrb[0].mxu0
        %1563 = vdwg.mxu0
        %v1564 = vpack.c.bf16 %v1561, %v1558
        %v1565 = vld [vmem:[%s605 + $0x20] sm:$0xf]
        %v1566 = vld [vmem:[%s605 + $0x24] sm:$0xf]
        %v1567 = vld [vmem:[%s605 + $0x28] sm:$0xf]
        %v1568 = vld [vmem:[%s605 + $0x2c] sm:$0xf]
        %v1573 = vunpack.c.l.b16 %v1565
        %v1574 = vunpack.c.l.b16 %v1566
        %v1575 = vunpack.c.l.b16 %v1567
        %v1576 = vunpack.c.l.b16 %v1568
        %v1577 = vpack.c.b16 %v1574, %v1573
        %v1578 = vpack.c.b16 %v1576, %v1575
        %v1582 = vsel %vm1061, %v1564, 0
        %1584 = vmatprep.subr.bf16.mxu0 0
        %1585 = vmatpush1.bf16.msra.mxu0 %v1577
        %1586 = vmatprep.subr.bf16.mxu0 0
        %1587 = vmatpush1.bf16.msra.mxu0 %v1578
        %1588 = vmatprep.subr.bf16.mxu0 0
        %1589 = vmatpush1.bf16.msra.mxu0 0
        %1590 = vmatprep.subr.bf16.mxu0 0
        %1591 = vmatpush1.bf16.msra.mxu0 0
        %1592 = vmatprep.subr.bf16.mxu0 0
        %1593 = vmatpush1.bf16.msra.mxu0 0
        %1594 = vmatprep.subr.bf16.mxu0 0
        %1595 = vmatpush1.bf16.msra.mxu0 0
        %1596 = vmatprep.subr.bf16.mxu0 0
        %1597 = vmatpush1.bf16.msra.mxu0 0
        %1598 = vmatprep.subr.bf16.mxu0 0
        %1599 = vmatpush1.bf16.msra.mxu0 0
        %1600 = vmatprep.subr.bf16.mxu0 0
        %1601 = vmatpush1.bf16.msra.mxu0 0
        %1602 = vmatprep.subr.bf16.mxu0 0
        %1603 = vmatpush1.bf16.msra.mxu0 0
        %1604 = vmatprep.subr.bf16.mxu0 0
        %1605 = vmatpush1.bf16.msra.mxu0 0
        %1606 = vmatprep.subr.bf16.mxu0 0
        %1607 = vmatpush1.bf16.msra.mxu0 0
        %1608 = vmatprep.subr.bf16.mxu0 0
        %1609 = vmatpush1.bf16.msra.mxu0 0
        %1610 = vmatprep.subr.bf16.mxu0 0
        %1611 = vmatpush1.bf16.msra.mxu0 0
        %1612 = vmatprep.subr.bf16.mxu0 0
        %1613 = vmatpush1.bf16.msra.mxu0 0
        %1614 = vmatprep.subr.bf16.mxu0 0
        %1615 = vmatpush1.bf16.msra.mxu0 0
        %1616 = vmatprep.mubr.bf16.mxu0 0
        %1617 = vmatmul.mubr.bf16.gmra.mrb[0].mxu0 %v1582
        %v1618 = vpop.f32.mrb[0].mxu0
        %v1619 = vadd.f32 0.0, %v1618
        %v1620 = vpop.f32.mrb[0].mxu0
        %v1621 = vpop.f32.mrb[0].mxu0
        %v1622 = vadd.f32 0.0, %v1621
        %v1623 = vpop.f32.mrb[0].mxu0
        %1624 = vdwg.mxu0
        %v1625 = vadd.f32 %v1430, %v1619
        %v1626 = vadd.f32 %v1433, %v1622
        %1627 = vrot.lane.b32.xlu0 %v1052, 32
        %v1628 = vpop.permute.xlu0 %1627
        %1629 = vrot.lane.b32.xlu0 %v1059, 32
        %v1630 = vpop.permute.xlu0 %1629
        %v1632 = vsel %vm1061, %v1628, 0
        %v1635 = vsel %vm1061, %v1630, 0
        %1637 = vmatprep.subr.bf16.mxu0 0
        %1638 = vmatpush1.bf16.xpose.msra.mxu0 %v1635
        %1639 = vmatprep.subr.bf16.mxu0 0
        %1640 = vmatpush1.bf16.xpose.msra.mxu0 0
        %1641 = vmatprep.subr.bf16.mxu0 0
        %1642 = vmatpush1.bf16.xpose.msra.mxu0 0
        %1643 = vmatprep.subr.bf16.mxu0 0
        %1644 = vmatpush1.bf16.xpose.msra.mxu0 0
        %1645 = vmatprep.subr.bf16.mxu0 0
        %1646 = vmatpush1.bf16.xpose.msra.mxu0 0
        %1647 = vmatprep.subr.bf16.mxu0 0
        %1648 = vmatpush1.bf16.xpose.msra.mxu0 0
        %1649 = vmatprep.subr.bf16.mxu0 0
        %1650 = vmatpush1.bf16.xpose.msra.mxu0 0
        %1651 = vmatprep.subr.bf16.mxu0 0
        %1652 = vmatpush1.bf16.xpose.msra.mxu0 0
        %1653 = vmatprep.subr.bf16.mxu0 0
        %1654 = vmatpush1.bf16.xpose.msra.mxu0 0
        %1655 = vmatprep.subr.bf16.mxu0 0
        %1656 = vmatpush1.bf16.xpose.msra.mxu0 0
        %1657 = vmatprep.subr.bf16.mxu0 0
        %1658 = vmatpush1.bf16.xpose.msra.mxu0 0
        %1659 = vmatprep.subr.bf16.mxu0 0
        %1660 = vmatpush1.bf16.xpose.msra.mxu0 0
        %1661 = vmatprep.subr.bf16.mxu0 0
        %1662 = vmatpush1.bf16.xpose.msra.mxu0 0
        %1663 = vmatprep.subr.bf16.mxu0 0
        %1664 = vmatpush1.bf16.xpose.msra.mxu0 0
        %1665 = vmatprep.subr.bf16.mxu0 0
        %1666 = vmatpush1.bf16.xpose.msra.mxu0 0
        %1667 = vmatprep.subr.bf16.mxu0 0
        %1668 = vmatpush1.bf16.xpose.msra.mxu0 0
        %1669 = vmatprep.mubr.bf16.mxu0 0
        %1670 = vmatmul.mubr.bf16.gmra.mrb[0].mxu0 %v1632
        %v1671 = vpop.f32.mrb[0].mxu0
        %v1672 = vadd.f32 0.0, %v1671
        %v1673 = vpop.f32.mrb[0].mxu0
        %v1674 = vpop.f32.mrb[0].mxu0
        %v1675 = vadd.f32 0.0, %v1674
        %v1676 = vpop.f32.mrb[0].mxu0
        %1677 = vdwg.mxu0
        %v1678 = vmul.f32 %v1672, 0.17677669
        %v1679 = vmul.f32 %v1675, 0.17677669
        %v1680 = vadd.f32 %v1678, %v636
        %v1681 = vadd.f32 %v1679, %v637
        %v1682 = vsel %vm1113, %v1680, -inf
        %1683 = vmax.xlane.f32.xlu0 %v1682
        %v1684 = vpop.xlane.xlu0 %1683
        %v1685 = vsel %vm1113, %v1681, -inf
        %1686 = vmax.xlane.f32.xlu0 %v1685
        %v1687 = vpop.xlane.xlu0 %1686
        %v1688 = vsub.f32 %v1680, %v1684
        %v1689 = vsub.f32 %v1681, %v1687
        %v1690 = vmul.f32 %v1688, 1.442695
        %v1691 = vpow.pop %v1690
        %v1692 = vmul.f32 %v1689, 1.442695
        %v1693 = vpow.pop %v1692
        %v1694 = vsel %vm1113, %v1691, 0.0
        %1695 = vadd.xlane.f32.xlu0 %v1694
        %v1696 = vpop.xlane.xlu0 %1695
        %v1697 = vsel %vm1113, %v1693, 0.0
        %1698 = vadd.xlane.f32.xlu0 %v1697
        %v1699 = vpop.xlane.xlu0 %1698
        %v1700 = vrcp.pop %v1696
        %v1701 = vmul.f32 %v1691, %v1700
        %v1702 = vrcp.pop %v1699
        %v1703 = vmul.f32 %v1693, %v1702
        %s1704 = scalar_lea.vmem %s615, 48
        %1705 = vst.msk [vmem:[%s1704] sm:$0xff] %vm1113, %v1701
        %1706 = vst.msk [vmem:[%s1704 + $0x8] sm:$0xff] %vm1113, %v1703
        %v1707 = vpack.c.bf16 %v1703, %v1701
        %1708 = vrot.lane.b32.xlu0 %v1060, 32
        %v1709 = vpop.permute.xlu0 %1708
        %v1712 = vsel %vm1113, %v1707, 0
        %1714 = vmatprep.subr.bf16.mxu0 0
        %1715 = vmatpush1.bf16.msra.mxu0 %v1709
        %1716 = vmatprep.subr.bf16.mxu0 0
        %1717 = vmatpush1.bf16.msra.mxu0 0
        %1718 = vmatprep.subr.bf16.mxu0 0
        %1719 = vmatpush1.bf16.msra.mxu0 0
        %1720 = vmatprep.subr.bf16.mxu0 0
        %1721 = vmatpush1.bf16.msra.mxu0 0
        %1722 = vmatprep.subr.bf16.mxu0 0
        %1723 = vmatpush1.bf16.msra.mxu0 0
        %1724 = vmatprep.subr.bf16.mxu0 0
        %1725 = vmatpush1.bf16.msra.mxu0 0
        %1726 = vmatprep.subr.bf16.mxu0 0
        %1727 = vmatpush1.bf16.msra.mxu0 0
        %1728 = vmatprep.subr.bf16.mxu0 0
        %1729 = vmatpush1.bf16.msra.mxu0 0
        %1730 = vmatprep.subr.bf16.mxu0 0
        %1731 = vmatpush1.bf16.msra.mxu0 0
        %1732 = vmatprep.subr.bf16.mxu0 0
        %1733 = vmatpush1.bf16.msra.mxu0 0
        %1734 = vmatprep.subr.bf16.mxu0 0
        %1735 = vmatpush1.bf16.msra.mxu0 0
        %1736 = vmatprep.subr.bf16.mxu0 0
        %1737 = vmatpush1.bf16.msra.mxu0 0
        %1738 = vmatprep.subr.bf16.mxu0 0
        %1739 = vmatpush1.bf16.msra.mxu0 0
        %1740 = vmatprep.subr.bf16.mxu0 0
        %1741 = vmatpush1.bf16.msra.mxu0 0
        %1742 = vmatprep.subr.bf16.mxu0 0
        %1743 = vmatpush1.bf16.msra.mxu0 0
        %1744 = vmatprep.subr.bf16.mxu0 0
        %1745 = vmatpush1.bf16.msra.mxu0 0
        %1746 = vmatprep.mubr.bf16.mxu0 0
        %1747 = vmatmul.mubr.bf16.gmra.mrb[0].mxu0 %v1712
        %v1748 = vpop.f32.mrb[0].mxu0
        %v1749 = vadd.f32 0.0, %v1748
        %v1750 = vpop.f32.mrb[0].mxu0
        %v1751 = vpop.f32.mrb[0].mxu0
        %v1752 = vadd.f32 0.0, %v1751
        %v1753 = vpop.f32.mrb[0].mxu0
        %1754 = vdwg.mxu0
        %v1755 = vpack.c.bf16 %v1752, %v1749
        %v1756 = vld [vmem:[%s605 + $0x30] sm:$0xf]
        %v1757 = vld [vmem:[%s605 + $0x34] sm:$0xf]
        %v1758 = vld [vmem:[%s605 + $0x38] sm:$0xf]
        %v1759 = vld [vmem:[%s605 + $0x3c] sm:$0xf]
        %v1764 = vunpack.c.l.b16 %v1756
        %v1765 = vunpack.c.l.b16 %v1757
        %v1766 = vunpack.c.l.b16 %v1758
        %v1767 = vunpack.c.l.b16 %v1759
        %v1768 = vpack.c.b16 %v1765, %v1764
        %v1769 = vpack.c.b16 %v1767, %v1766
        %v1773 = vsel %vm1061, %v1755, 0
        %1775 = vmatprep.subr.bf16.mxu0 0
        %1776 = vmatpush1.bf16.msra.mxu0 %v1768
        %1777 = vmatprep.subr.bf16.mxu0 0
        %1778 = vmatpush1.bf16.msra.mxu0 %v1769
        %1779 = vmatprep.subr.bf16.mxu0 0
        %1780 = vmatpush1.bf16.msra.mxu0 0
        %1781 = vmatprep.subr.bf16.mxu0 0
        %1782 = vmatpush1.bf16.msra.mxu0 0
        %1783 = vmatprep.subr.bf16.mxu0 0
        %1784 = vmatpush1.bf16.msra.mxu0 0
        %1785 = vmatprep.subr.bf16.mxu0 0
        %1786 = vmatpush1.bf16.msra.mxu0 0
        %1787 = vmatprep.subr.bf16.mxu0 0
        %1788 = vmatpush1.bf16.msra.mxu0 0
        %1789 = vmatprep.subr.bf16.mxu0 0
        %1790 = vmatpush1.bf16.msra.mxu0 0
        %1791 = vmatprep.subr.bf16.mxu0 0
        %1792 = vmatpush1.bf16.msra.mxu0 0
        %1793 = vmatprep.subr.bf16.mxu0 0
        %1794 = vmatpush1.bf16.msra.mxu0 0
        %1795 = vmatprep.subr.bf16.mxu0 0
        %1796 = vmatpush1.bf16.msra.mxu0 0
        %1797 = vmatprep.subr.bf16.mxu0 0
        %1798 = vmatpush1.bf16.msra.mxu0 0
        %1799 = vmatprep.subr.bf16.mxu0 0
        %1800 = vmatpush1.bf16.msra.mxu0 0
        %1801 = vmatprep.subr.bf16.mxu0 0
        %1802 = vmatpush1.bf16.msra.mxu0 0
        %1803 = vmatprep.subr.bf16.mxu0 0
        %1804 = vmatpush1.bf16.msra.mxu0 0
        %1805 = vmatprep.subr.bf16.mxu0 0
        %1806 = vmatpush1.bf16.msra.mxu0 0
        %1807 = vmatprep.mubr.bf16.mxu0 0
        %1808 = vmatmul.mubr.bf16.gmra.mrb[0].mxu0 %v1773
        %v1809 = vpop.f32.mrb[0].mxu0
        %v1810 = vadd.f32 0.0, %v1809
        %v1811 = vpop.f32.mrb[0].mxu0
        %v1812 = vpop.f32.mrb[0].mxu0
        %v1813 = vadd.f32 0.0, %v1812
        %v1814 = vpop.f32.mrb[0].mxu0
        %1815 = vdwg.mxu0
        %v1816 = vadd.f32 %v1625, %v1810
        %v1817 = vadd.f32 %v1626, %v1813
        %1818 = vst [vmem:[%s620] sm:$0xff] %v1816
        %1819 = vst [vmem:[%s620 + $0x8] sm:$0xff] %v1817
        %v1820 = vadd.f32 %v630, %v1816
        %v1821 = vadd.f32 %v631, %v1817
        %v1822 = vld [vmem:[%s600] sm:$0x1]
        %v1823 = vmul.f32 %v1820, %v1820
        %v1824 = vmul.f32 %v1821, %v1821
        %1825 = vadd.xlane.f32.xlu0 %v1823
        %v1826 = vpop.xlane.xlu0 %1825
        %1827 = vadd.xlane.f32.xlu0 %v1824
        %v1828 = vpop.xlane.xlu0 %1827
        %v1829 = vmul.f32 %v1826, %v645
        %v1830 = vmul.f32 %v1828, %v645
        %v1831 = vadd.f32 %v1829, 1e-06
        %v1832 = vadd.f32 %v1830, 1e-06
        %v1833 = vrsqrt.pop %v1831
        %v1834 = vrsqrt.pop %v1832
        %v1835 = vmul.f32 %v1820, %v1833
        %v1836 = vmul.f32 %v1821, %v1834
        %v1838 = vlaneseq
        %v1839 = vshrl.u32 %v1838, 7
        %v1840 = vsub.s32 0, %v1839
        %v1841 = vrot.slane %v1822, %v1840
        %v1843 = vmul.f32 %v1835, %v1841
        %v1844 = vmul.f32 %v1836, %v1841
        %v1845 = vpack.c.bf16 %v1844, %v1843
        %v1846 = vld [vmem:[%s520] sm:$0xff]
        %v1847 = vld [vmem:[%s520 + $0x8] sm:$0xff]
        %v1848 = vld [vmem:[%s520 + $0x10] sm:$0xff]
        %v1849 = vld [vmem:[%s520 + $0x18] sm:$0xff]
        %v1850 = vld [vmem:[%s520 + $0x20] sm:$0xff]
        %v1851 = vld [vmem:[%s520 + $0x28] sm:$0xff]
        %v1852 = vld [vmem:[%s520 + $0x30] sm:$0xff]
        %v1853 = vld [vmem:[%s520 + $0x38] sm:$0xff]
        %v1854 = vld [vmem:[%s520 + $0x40] sm:$0xff]
        %v1855 = vld [vmem:[%s520 + $0x48] sm:$0xff]
        %v1856 = vld [vmem:[%s520 + $0x50] sm:$0xff]
        %v1857 = vld [vmem:[%s520 + $0x58] sm:$0xff]
        %v1858 = vld [vmem:[%s520 + $0x60] sm:$0xff]
        %v1859 = vld [vmem:[%s520 + $0x68] sm:$0xff]
        %v1860 = vld [vmem:[%s520 + $0x70] sm:$0xff]
        %v1861 = vld [vmem:[%s520 + $0x78] sm:$0xff]
        %v1862 = vld [vmem:[%s520 + $0x80] sm:$0xff]
        %v1863 = vld [vmem:[%s520 + $0x88] sm:$0xff]
        %v1864 = vld [vmem:[%s520 + $0x90] sm:$0xff]
        %v1865 = vld [vmem:[%s520 + $0x98] sm:$0xff]
        %v1866 = vld [vmem:[%s520 + $0xa0] sm:$0xff]
        %v1867 = vld [vmem:[%s520 + $0xa8] sm:$0xff]
        %v1868 = vld [vmem:[%s520 + $0xb0] sm:$0xff]
        %v1869 = vld [vmem:[%s520 + $0xb8] sm:$0xff]
        %v1870 = vld [vmem:[%s520 + $0xc0] sm:$0xff]
        %v1871 = vld [vmem:[%s520 + $0xc8] sm:$0xff]
        %v1872 = vld [vmem:[%s520 + $0xd0] sm:$0xff]
        %v1873 = vld [vmem:[%s520 + $0xd8] sm:$0xff]
        %v1874 = vld [vmem:[%s520 + $0xe0] sm:$0xff]
        %v1875 = vld [vmem:[%s520 + $0xe8] sm:$0xff]
        %v1876 = vld [vmem:[%s520 + $0xf0] sm:$0xff]
        %v1877 = vld [vmem:[%s520 + $0xf8] sm:$0xff]
        %v1910 = vunpack.c.l.b16 %v1846
        %v1911 = vunpack.c.h.b16 %v1846
        %v1912 = vunpack.c.l.b16 %v1847
        %v1913 = vunpack.c.h.b16 %v1847
        %v1914 = vunpack.c.l.b16 %v1848
        %v1915 = vunpack.c.h.b16 %v1848
        %v1916 = vunpack.c.l.b16 %v1849
        %v1917 = vunpack.c.h.b16 %v1849
        %v1918 = vunpack.c.l.b16 %v1850
        %v1919 = vunpack.c.h.b16 %v1850
        %v1920 = vunpack.c.l.b16 %v1851
        %v1921 = vunpack.c.h.b16 %v1851
        %v1922 = vunpack.c.l.b16 %v1852
        %v1923 = vunpack.c.h.b16 %v1852
        %v1924 = vunpack.c.l.b16 %v1853
        %v1925 = vunpack.c.h.b16 %v1853
        %v1926 = vunpack.c.l.b16 %v1854
        %v1927 = vunpack.c.h.b16 %v1854
        %v1928 = vunpack.c.l.b16 %v1855
        %v1929 = vunpack.c.h.b16 %v1855
        %v1930 = vunpack.c.l.b16 %v1856
        %v1931 = vunpack.c.h.b16 %v1856
        %v1932 = vunpack.c.l.b16 %v1857
        %v1933 = vunpack.c.h.b16 %v1857
        %v1934 = vunpack.c.l.b16 %v1858
        %v1935 = vunpack.c.h.b16 %v1858
        %v1936 = vunpack.c.l.b16 %v1859
        %v1937 = vunpack.c.h.b16 %v1859
        %v1938 = vunpack.c.l.b16 %v1860
        %v1939 = vunpack.c.h.b16 %v1860
        %v1940 = vunpack.c.l.b16 %v1861
        %v1941 = vunpack.c.h.b16 %v1861
        %v1942 = vunpack.c.l.b16 %v1862
        %v1943 = vunpack.c.h.b16 %v1862
        %v1944 = vunpack.c.l.b16 %v1863
        %v1945 = vunpack.c.h.b16 %v1863
        %v1946 = vunpack.c.l.b16 %v1864
        %v1947 = vunpack.c.h.b16 %v1864
        %v1948 = vunpack.c.l.b16 %v1865
        %v1949 = vunpack.c.h.b16 %v1865
        %v1950 = vunpack.c.l.b16 %v1866
        %v1951 = vunpack.c.h.b16 %v1866
        %v1952 = vunpack.c.l.b16 %v1867
        %v1953 = vunpack.c.h.b16 %v1867
        %v1954 = vunpack.c.l.b16 %v1868
        %v1955 = vunpack.c.h.b16 %v1868
        %v1956 = vunpack.c.l.b16 %v1869
        %v1957 = vunpack.c.h.b16 %v1869
        %v1958 = vunpack.c.l.b16 %v1870
        %v1959 = vunpack.c.h.b16 %v1870
        %v1960 = vunpack.c.l.b16 %v1871
        %v1961 = vunpack.c.h.b16 %v1871
        %v1962 = vunpack.c.l.b16 %v1872
        %v1963 = vunpack.c.h.b16 %v1872
        %v1964 = vunpack.c.l.b16 %v1873
        %v1965 = vunpack.c.h.b16 %v1873
        %v1966 = vunpack.c.l.b16 %v1874
        %v1967 = vunpack.c.h.b16 %v1874
        %v1968 = vunpack.c.l.b16 %v1875
        %v1969 = vunpack.c.h.b16 %v1875
        %v1970 = vunpack.c.l.b16 %v1876
        %v1971 = vunpack.c.h.b16 %v1876
        %v1972 = vunpack.c.l.b16 %v1877
        %v1973 = vunpack.c.h.b16 %v1877
        %v1974 = vpack.c.b16 %v1914, %v1910
        %v1975 = vpack.c.b16 %v1915, %v1911
        %v1976 = vpack.c.b16 %v1916, %v1912
        %v1977 = vpack.c.b16 %v1917, %v1913
        %v1978 = vpack.c.b16 %v1922, %v1918
        %v1979 = vpack.c.b16 %v1923, %v1919
        %v1980 = vpack.c.b16 %v1924, %v1920
        %v1981 = vpack.c.b16 %v1925, %v1921
        %v1982 = vpack.c.b16 %v1930, %v1926
        %v1983 = vpack.c.b16 %v1931, %v1927
        %v1984 = vpack.c.b16 %v1932, %v1928
        %v1985 = vpack.c.b16 %v1933, %v1929
        %v1986 = vpack.c.b16 %v1938, %v1934
        %v1987 = vpack.c.b16 %v1939, %v1935
        %v1988 = vpack.c.b16 %v1940, %v1936
        %v1989 = vpack.c.b16 %v1941, %v1937
        %v1990 = vpack.c.b16 %v1946, %v1942
        %v1991 = vpack.c.b16 %v1947, %v1943
        %v1992 = vpack.c.b16 %v1948, %v1944
        %v1993 = vpack.c.b16 %v1949, %v1945
        %v1994 = vpack.c.b16 %v1954, %v1950
        %v1995 = vpack.c.b16 %v1955, %v1951
        %v1996 = vpack.c.b16 %v1956, %v1952
        %v1997 = vpack.c.b16 %v1957, %v1953
        %v1998 = vpack.c.b16 %v1962, %v1958
        %v1999 = vpack.c.b16 %v1963, %v1959
        %v2000 = vpack.c.b16 %v1964, %v1960
        %v2001 = vpack.c.b16 %v1965, %v1961
        %v2002 = vpack.c.b16 %v1970, %v1966
        %v2003 = vpack.c.b16 %v1971, %v1967
        %v2004 = vpack.c.b16 %v1972, %v1968
        %v2005 = vpack.c.b16 %v1973, %v1969
        %2038 = vmatprep.subr.bf16.mxu0 %v1975
        %2039 = vmatpush1.bf16.msra.mxu0 %v1974
        %2040 = vmatprep.subr.bf16.mxu0 %v1979
        %2041 = vmatpush1.bf16.msra.mxu0 %v1978
        %2042 = vmatprep.subr.bf16.mxu0 %v1983
        %2043 = vmatpush1.bf16.msra.mxu0 %v1982
        %2044 = vmatprep.subr.bf16.mxu0 %v1987
        %2045 = vmatpush1.bf16.msra.mxu0 %v1986
        %2046 = vmatprep.subr.bf16.mxu0 %v1991
        %2047 = vmatpush1.bf16.msra.mxu0 %v1990
        %2048 = vmatprep.subr.bf16.mxu0 %v1995
        %2049 = vmatpush1.bf16.msra.mxu0 %v1994
        %2050 = vmatprep.subr.bf16.mxu0 %v1999
        %2051 = vmatpush1.bf16.msra.mxu0 %v1998
        %2052 = vmatprep.subr.bf16.mxu0 %v2003
        %2053 = vmatpush1.bf16.msra.mxu0 %v2002
        %2054 = vmatprep.subr.bf16.mxu0 0
        %2055 = vmatpush1.bf16.msra.mxu0 0
        %2056 = vmatprep.subr.bf16.mxu0 0
        %2057 = vmatpush1.bf16.msra.mxu0 0
        %2058 = vmatprep.subr.bf16.mxu0 0
        %2059 = vmatpush1.bf16.msra.mxu0 0
        %2060 = vmatprep.subr.bf16.mxu0 0
        %2061 = vmatpush1.bf16.msra.mxu0 0
        %2062 = vmatprep.subr.bf16.mxu0 0
        %2063 = vmatpush1.bf16.msra.mxu0 0
        %2064 = vmatprep.subr.bf16.mxu0 0
        %2065 = vmatpush1.bf16.msra.mxu0 0
        %2066 = vmatprep.subr.bf16.mxu0 0
        %2067 = vmatpush1.bf16.msra.mxu0 0
        %2068 = vmatprep.subr.bf16.mxu0 0
        %2069 = vmatpush1.bf16.msra.mxu0 0
        %2070 = vmatprep.mubr.bf16.mxu0 0
        %2071 = vmatmul.mubr.bf16.gmra.mrb[0].mxu0 %v1845
        %v2072 = vpop.f32.mrb[0].mxu0
        %v2073 = vadd.f32 0.0, %v2072
        %v2074 = vpop.f32.mrb[0].mxu0
        %v2075 = vadd.f32 0.0, %v2074
        %v2076 = vpop.f32.mrb[0].mxu0
        %v2077 = vadd.f32 0.0, %v2076
        %v2078 = vpop.f32.mrb[0].mxu0
        %v2079 = vadd.f32 0.0, %v2078
        %2080 = vdwg.mxu0
        %2081 = vmatprep.subr.bf16.mxu0 %v1977
        %2082 = vmatpush1.bf16.msra.mxu0 %v1976
        %2083 = vmatprep.subr.bf16.mxu0 %v1981
        %2084 = vmatpush1.bf16.msra.mxu0 %v1980
        %2085 = vmatprep.subr.bf16.mxu0 %v1985
        %2086 = vmatpush1.bf16.msra.mxu0 %v1984
        %2087 = vmatprep.subr.bf16.mxu0 %v1989
        %2088 = vmatpush1.bf16.msra.mxu0 %v1988
        %2089 = vmatprep.subr.bf16.mxu0 %v1993
        %2090 = vmatpush1.bf16.msra.mxu0 %v1992
        %2091 = vmatprep.subr.bf16.mxu0 %v1997
        %2092 = vmatpush1.bf16.msra.mxu0 %v1996
        %2093 = vmatprep.subr.bf16.mxu0 %v2001
        %2094 = vmatpush1.bf16.msra.mxu0 %v2000
        %2095 = vmatprep.subr.bf16.mxu0 %v2005
        %2096 = vmatpush1.bf16.msra.mxu0 %v2004
        %2097 = vmatprep.subr.bf16.mxu0 0
        %2098 = vmatpush1.bf16.msra.mxu0 0
        %2099 = vmatprep.subr.bf16.mxu0 0
        %2100 = vmatpush1.bf16.msra.mxu0 0
        %2101 = vmatprep.subr.bf16.mxu0 0
        %2102 = vmatpush1.bf16.msra.mxu0 0
        %2103 = vmatprep.subr.bf16.mxu0 0
        %2104 = vmatpush1.bf16.msra.mxu0 0
        %2105 = vmatprep.subr.bf16.mxu0 0
        %2106 = vmatpush1.bf16.msra.mxu0 0
        %2107 = vmatprep.subr.bf16.mxu0 0
        %2108 = vmatpush1.bf16.msra.mxu0 0
        %2109 = vmatprep.subr.bf16.mxu0 0
        %2110 = vmatpush1.bf16.msra.mxu0 0
        %2111 = vmatprep.subr.bf16.mxu0 0
        %2112 = vmatpush1.bf16.msra.mxu0 0
        %2113 = vmatprep.mubr.bf16.mxu0 0
        %2114 = vmatmul.mubr.bf16.gmra.mrb[0].mxu0 %v1845
        %v2115 = vpop.f32.mrb[0].mxu0
        %v2116 = vadd.f32 0.0, %v2115
        %v2117 = vpop.f32.mrb[0].mxu0
        %v2118 = vadd.f32 0.0, %v2117
        %v2119 = vpop.f32.mrb[0].mxu0
        %v2120 = vadd.f32 0.0, %v2119
        %v2121 = vpop.f32.mrb[0].mxu0
        %v2122 = vadd.f32 0.0, %v2121
        %2123 = vdwg.mxu0
        %v2124 = vxor.u32 %v2073, 2147483648
        %v2125 = vxor.u32 %v2075, 2147483648
        %v2126 = vxor.u32 %v2077, 2147483648
        %v2127 = vxor.u32 %v2079, 2147483648
        %v2128 = vmul.f32 %v2124, 1.442695
        %v2129 = vpow.pop %v2128
        %v2130 = vmul.f32 %v2125, 1.442695
        %v2131 = vpow.pop %v2130
        %v2132 = vmul.f32 %v2126, 1.442695
        %v2133 = vpow.pop %v2132
        %v2134 = vmul.f32 %v2127, 1.442695
        %v2135 = vpow.pop %v2134
        %v2136 = vadd.f32 %v2129, 1.0
        %v2137 = vadd.f32 %v2131, 1.0
        %v2138 = vadd.f32 %v2133, 1.0
        %v2139 = vadd.f32 %v2135, 1.0
        %v2140 = vrcp.pop %v2136
        %v2141 = vmul.f32 1.0, %v2140
        %v2142 = vrcp.pop %v2137
        %v2143 = vmul.f32 1.0, %v2142
        %v2144 = vrcp.pop %v2138
        %v2145 = vmul.f32 1.0, %v2144
        %v2146 = vrcp.pop %v2139
        %v2147 = vmul.f32 1.0, %v2146
        %v2148 = vmul.f32 %v2073, %v2141
        %v2149 = vmul.f32 %v2075, %v2143
        %v2150 = vmul.f32 %v2077, %v2145
        %v2151 = vmul.f32 %v2079, %v2147
        %v2152 = vmul.f32 %v2148, %v2116
        %v2153 = vmul.f32 %v2149, %v2118
        %v2154 = vmul.f32 %v2150, %v2120
        %v2155 = vmul.f32 %v2151, %v2122
        %v2156 = vpack.c.bf16 %v2154, %v2152
        %v2157 = vpack.c.bf16 %v2155, %v2153
        %v2158 = vld [vmem:[%s610] sm:$0xf]
        %v2159 = vld [vmem:[%s610 + $0x4] sm:$0xf]
        %v2160 = vld [vmem:[%s610 + $0x8] sm:$0xf]
        %v2161 = vld [vmem:[%s610 + $0xc] sm:$0xf]
        %v2162 = vld [vmem:[%s610 + $0x10] sm:$0xf]
        %v2163 = vld [vmem:[%s610 + $0x14] sm:$0xf]
        %v2164 = vld [vmem:[%s610 + $0x18] sm:$0xf]
        %v2165 = vld [vmem:[%s610 + $0x1c] sm:$0xf]
        %v2166 = vld [vmem:[%s610 + $0x20] sm:$0xf]
        %v2167 = vld [vmem:[%s610 + $0x24] sm:$0xf]
        %v2168 = vld [vmem:[%s610 + $0x28] sm:$0xf]
        %v2169 = vld [vmem:[%s610 + $0x2c] sm:$0xf]
        %v2170 = vld [vmem:[%s610 + $0x30] sm:$0xf]
        %v2171 = vld [vmem:[%s610 + $0x34] sm:$0xf]
        %v2172 = vld [vmem:[%s610 + $0x38] sm:$0xf]
        %v2173 = vld [vmem:[%s610 + $0x3c] sm:$0xf]
        %v2174 = vld [vmem:[%s610 + $0x40] sm:$0xf]
        %v2175 = vld [vmem:[%s610 + $0x44] sm:$0xf]
        %v2176 = vld [vmem:[%s610 + $0x48] sm:$0xf]
        %v2177 = vld [vmem:[%s610 + $0x4c] sm:$0xf]
        %v2178 = vld [vmem:[%s610 + $0x50] sm:$0xf]
        %v2179 = vld [vmem:[%s610 + $0x54] sm:$0xf]
        %v2180 = vld [vmem:[%s610 + $0x58] sm:$0xf]
        %v2181 = vld [vmem:[%s610 + $0x5c] sm:$0xf]
        %v2182 = vld [vmem:[%s610 + $0x60] sm:$0xf]
        %v2183 = vld [vmem:[%s610 + $0x64] sm:$0xf]
        %v2184 = vld [vmem:[%s610 + $0x68] sm:$0xf]
        %v2185 = vld [vmem:[%s610 + $0x6c] sm:$0xf]
        %v2186 = vld [vmem:[%s610 + $0x70] sm:$0xf]
        %v2187 = vld [vmem:[%s610 + $0x74] sm:$0xf]
        %v2188 = vld [vmem:[%s610 + $0x78] sm:$0xf]
        %v2189 = vld [vmem:[%s610 + $0x7c] sm:$0xf]
        %v2222 = vunpack.c.l.b16 %v2158
        %v2223 = vunpack.c.l.b16 %v2159
        %v2224 = vunpack.c.l.b16 %v2160
        %v2225 = vunpack.c.l.b16 %v2161
        %v2226 = vunpack.c.l.b16 %v2162
        %v2227 = vunpack.c.l.b16 %v2163
        %v2228 = vunpack.c.l.b16 %v2164
        %v2229 = vunpack.c.l.b16 %v2165
        %v2230 = vunpack.c.l.b16 %v2166
        %v2231 = vunpack.c.l.b16 %v2167
        %v2232 = vunpack.c.l.b16 %v2168
        %v2233 = vunpack.c.l.b16 %v2169
        %v2234 = vunpack.c.l.b16 %v2170
        %v2235 = vunpack.c.l.b16 %v2171
        %v2236 = vunpack.c.l.b16 %v2172
        %v2237 = vunpack.c.l.b16 %v2173
        %v2238 = vunpack.c.l.b16 %v2174
        %v2239 = vunpack.c.l.b16 %v2175
        %v2240 = vunpack.c.l.b16 %v2176
        %v2241 = vunpack.c.l.b16 %v2177
        %v2242 = vunpack.c.l.b16 %v2178
        %v2243 = vunpack.c.l.b16 %v2179
        %v2244 = vunpack.c.l.b16 %v2180
        %v2245 = vunpack.c.l.b16 %v2181
        %v2246 = vunpack.c.l.b16 %v2182
        %v2247 = vunpack.c.l.b16 %v2183
        %v2248 = vunpack.c.l.b16 %v2184
        %v2249 = vunpack.c.l.b16 %v2185
        %v2250 = vunpack.c.l.b16 %v2186
        %v2251 = vunpack.c.l.b16 %v2187
        %v2252 = vunpack.c.l.b16 %v2188
        %v2253 = vunpack.c.l.b16 %v2189
        %v2254 = vpack.c.b16 %v2223, %v2222
        %v2255 = vpack.c.b16 %v2225, %v2224
        %v2256 = vpack.c.b16 %v2227, %v2226
        %v2257 = vpack.c.b16 %v2229, %v2228
        %v2258 = vpack.c.b16 %v2231, %v2230
        %v2259 = vpack.c.b16 %v2233, %v2232
        %v2260 = vpack.c.b16 %v2235, %v2234
        %v2261 = vpack.c.b16 %v2237, %v2236
        %v2262 = vpack.c.b16 %v2239, %v2238
        %v2263 = vpack.c.b16 %v2241, %v2240
        %v2264 = vpack.c.b16 %v2243, %v2242
        %v2265 = vpack.c.b16 %v2245, %v2244
        %v2266 = vpack.c.b16 %v2247, %v2246
        %v2267 = vpack.c.b16 %v2249, %v2248
        %v2268 = vpack.c.b16 %v2251, %v2250
        %v2269 = vpack.c.b16 %v2253, %v2252
        %2286 = vmatprep.subr.bf16.mxu0 0
        %2287 = vmatpush1.bf16.msra.mxu0 %v2254
        %2288 = vmatprep.subr.bf16.mxu0 0
        %2289 = vmatpush1.bf16.msra.mxu0 %v2255
        %2290 = vmatprep.subr.bf16.mxu0 0
        %2291 = vmatpush1.bf16.msra.mxu0 %v2256
        %2292 = vmatprep.subr.bf16.mxu0 0
        %2293 = vmatpush1.bf16.msra.mxu0 %v2257
        %2294 = vmatprep.subr.bf16.mxu0 0
        %2295 = vmatpush1.bf16.msra.mxu0 %v2258
        %2296 = vmatprep.subr.bf16.mxu0 0
        %2297 = vmatpush1.bf16.msra.mxu0 %v2259
        %2298 = vmatprep.subr.bf16.mxu0 0
        %2299 = vmatpush1.bf16.msra.mxu0 %v2260
        %2300 = vmatprep.subr.bf16.mxu0 0
        %2301 = vmatpush1.bf16.msra.mxu0 %v2261
        %2302 = vmatprep.subr.bf16.mxu0 0
        %2303 = vmatpush1.bf16.msra.mxu0 %v2262
        %2304 = vmatprep.subr.bf16.mxu0 0
        %2305 = vmatpush1.bf16.msra.mxu0 %v2263
        %2306 = vmatprep.subr.bf16.mxu0 0
        %2307 = vmatpush1.bf16.msra.mxu0 %v2264
        %2308 = vmatprep.subr.bf16.mxu0 0
        %2309 = vmatpush1.bf16.msra.mxu0 %v2265
        %2310 = vmatprep.subr.bf16.mxu0 0
        %2311 = vmatpush1.bf16.msra.mxu0 %v2266
        %2312 = vmatprep.subr.bf16.mxu0 0
        %2313 = vmatpush1.bf16.msra.mxu0 %v2267
        %2314 = vmatprep.subr.bf16.mxu0 0
        %2315 = vmatpush1.bf16.msra.mxu0 %v2268
        %2316 = vmatprep.subr.bf16.mxu0 0
        %2317 = vmatpush1.bf16.msra.mxu0 %v2269
        %2318 = vmatprep.mubr.bf16.mxu0 %v2157
        %2319 = vmatmul.mubr.bf16.gmra.mrb[0].mxu0 %v2156
        %v2320 = vpop.f32.mrb[0].mxu0
        %v2321 = vadd.f32 0.0, %v2320
        %v2322 = vpop.f32.mrb[0].mxu0
        %v2323 = vpop.f32.mrb[0].mxu0
        %v2324 = vadd.f32 0.0, %v2323
        %v2325 = vpop.f32.mrb[0].mxu0
        %2326 = vdwg.mxu0
        %v2327 = vadd.f32 %v1820, %v2321
        %v2328 = vadd.f32 %v1821, %v2324
        %2329 = vst [vmem:[#allocation2] sm:$0xff] %v2327
        %2330 = vst [vmem:[#allocation2 + $0x8] sm:$0xff] %v2328
        %p2331 = scmp.eq.s32.totalorder %s33, 1
        // Predicated region
        $region85: #{llama_forward.1} parent=67 // pred_check
          %p2332 = pneg %p2331
        $region86: #{llama_forward.1} parent=67 // pred_check_branch
          %2334 = sbr.rel (%p2332) target = $region88
        $region87: #{llama_forward.1} parent=67 // pred_region
          %v2335 = vld [vmem:[%s10] sm:$0x1]
          %v2336 = vmul.f32 %v2327, %v2327
          %v2337 = vmul.f32 %v2328, %v2328
          %2338 = vadd.xlane.f32.xlu0 %v2336
          %v2339 = vpop.xlane.xlu0 %2338
          %2340 = vadd.xlane.f32.xlu0 %v2337
          %v2341 = vpop.xlane.xlu0 %2340
          %v2342 = vmul.f32 %v2339, %v645
          %v2343 = vmul.f32 %v2341, %v645
          %v2344 = vadd.f32 %v2342, 1e-06
          %v2345 = vadd.f32 %v2343, 1e-06
          %v2346 = vrsqrt.pop %v2344
          %v2347 = vrsqrt.pop %v2345
          %v2348 = vmul.f32 %v2327, %v2346
          %v2349 = vmul.f32 %v2328, %v2347
          %v2351 = vlaneseq
          %v2352 = vshrl.u32 %v2351, 7
          %v2353 = vsub.s32 0, %v2352
          %v2354 = vrot.slane %v2335, %v2353
          %v2356 = vmul.f32 %v2348, %v2354
          %v2357 = vmul.f32 %v2349, %v2354
          %v2358 = vpack.c.bf16 %v2357, %v2356
          %v2359 = vld [vmem:[#allocation8] sm:$0xff]
          %v2360 = vld [vmem:[#allocation8 + $0x8] sm:$0xff]
          %v2361 = vld [vmem:[#allocation8 + $0x10] sm:$0xff]
          %v2362 = vld [vmem:[#allocation8 + $0x18] sm:$0xff]
          %v2363 = vld [vmem:[#allocation8 + $0x20] sm:$0xff]
          %v2364 = vld [vmem:[#allocation8 + $0x28] sm:$0xff]
          %v2365 = vld [vmem:[#allocation8 + $0x30] sm:$0xff]
          %v2366 = vld [vmem:[#allocation8 + $0x38] sm:$0xff]
          %v2367 = vld [vmem:[#allocation8 + $0x40] sm:$0xff]
          %v2368 = vld [vmem:[#allocation8 + $0x48] sm:$0xff]
          %v2369 = vld [vmem:[#allocation8 + $0x50] sm:$0xff]
          %v2370 = vld [vmem:[#allocation8 + $0x58] sm:$0xff]
          %v2371 = vld [vmem:[#allocation8 + $0x60] sm:$0xff]
          %v2372 = vld [vmem:[#allocation8 + $0x68] sm:$0xff]
          %v2373 = vld [vmem:[#allocation8 + $0x70] sm:$0xff]
          %v2374 = vld [vmem:[#allocation8 + $0x78] sm:$0xff]
          %v2391 = vunpack.c.l.b16 %v2359
          %v2392 = vunpack.c.h.b16 %v2359
          %v2393 = vunpack.c.l.b16 %v2360
          %v2394 = vunpack.c.h.b16 %v2360
          %v2395 = vunpack.c.l.b16 %v2361
          %v2396 = vunpack.c.h.b16 %v2361
          %v2397 = vunpack.c.l.b16 %v2362
          %v2398 = vunpack.c.h.b16 %v2362
          %v2399 = vunpack.c.l.b16 %v2363
          %v2400 = vunpack.c.h.b16 %v2363
          %v2401 = vunpack.c.l.b16 %v2364
          %v2402 = vunpack.c.h.b16 %v2364
          %v2403 = vunpack.c.l.b16 %v2365
          %v2404 = vunpack.c.h.b16 %v2365
          %v2405 = vunpack.c.l.b16 %v2366
          %v2406 = vunpack.c.h.b16 %v2366
          %v2407 = vunpack.c.l.b16 %v2367
          %v2408 = vunpack.c.h.b16 %v2367
          %v2409 = vunpack.c.l.b16 %v2368
          %v2410 = vunpack.c.h.b16 %v2368
          %v2411 = vunpack.c.l.b16 %v2369
          %v2412 = vunpack.c.h.b16 %v2369
          %v2413 = vunpack.c.l.b16 %v2370
          %v2414 = vunpack.c.h.b16 %v2370
          %v2415 = vunpack.c.l.b16 %v2371
          %v2416 = vunpack.c.h.b16 %v2371
          %v2417 = vunpack.c.l.b16 %v2372
          %v2418 = vunpack.c.h.b16 %v2372
          %v2419 = vunpack.c.l.b16 %v2373
          %v2420 = vunpack.c.h.b16 %v2373
          %v2421 = vunpack.c.l.b16 %v2374
          %v2422 = vunpack.c.h.b16 %v2374
          %v2423 = vpack.c.b16 %v2393, %v2391
          %v2424 = vpack.c.b16 %v2394, %v2392
          %v2425 = vpack.c.b16 %v2397, %v2395
          %v2426 = vpack.c.b16 %v2398, %v2396
          %v2427 = vpack.c.b16 %v2401, %v2399
          %v2428 = vpack.c.b16 %v2402, %v2400
          %v2429 = vpack.c.b16 %v2405, %v2403
          %v2430 = vpack.c.b16 %v2406, %v2404
          %v2431 = vpack.c.b16 %v2409, %v2407
          %v2432 = vpack.c.b16 %v2410, %v2408
          %v2433 = vpack.c.b16 %v2413, %v2411
          %v2434 = vpack.c.b16 %v2414, %v2412
          %v2435 = vpack.c.b16 %v2417, %v2415
          %v2436 = vpack.c.b16 %v2418, %v2416
          %v2437 = vpack.c.b16 %v2421, %v2419
          %v2438 = vpack.c.b16 %v2422, %v2420
          %2455 = vmatprep.subr.bf16.mxu0 %v2424
          %2456 = vmatpush1.bf16.msra.mxu0 %v2423
          %2457 = vmatprep.subr.bf16.mxu0 %v2426
          %2458 = vmatpush1.bf16.msra.mxu0 %v2425
          %2459 = vmatprep.subr.bf16.mxu0 %v2428
          %2460 = vmatpush1.bf16.msra.mxu0 %v2427
          %2461 = vmatprep.subr.bf16.mxu0 %v2430
          %2462 = vmatpush1.bf16.msra.mxu0 %v2429
          %2463 = vmatprep.subr.bf16.mxu0 %v2432
          %2464 = vmatpush1.bf16.msra.mxu0 %v2431
          %2465 = vmatprep.subr.bf16.mxu0 %v2434
          %2466 = vmatpush1.bf16.msra.mxu0 %v2433
          %2467 = vmatprep.subr.bf16.mxu0 %v2436
          %2468 = vmatpush1.bf16.msra.mxu0 %v2435
          %2469 = vmatprep.subr.bf16.mxu0 %v2438
          %2470 = vmatpush1.bf16.msra.mxu0 %v2437
          %2471 = vmatprep.subr.bf16.mxu0 0
          %2472 = vmatpush1.bf16.msra.mxu0 0
          %2473 = vmatprep.subr.bf16.mxu0 0
          %2474 = vmatpush1.bf16.msra.mxu0 0
          %2475 = vmatprep.subr.bf16.mxu0 0
          %2476 = vmatpush1.bf16.msra.mxu0 0
          %2477 = vmatprep.subr.bf16.mxu0 0
          %2478 = vmatpush1.bf16.msra.mxu0 0
          %2479 = vmatprep.subr.bf16.mxu0 0
          %2480 = vmatpush1.bf16.msra.mxu0 0
          %2481 = vmatprep.subr.bf16.mxu0 0
          %2482 = vmatpush1.bf16.msra.mxu0 0
          %2483 = vmatprep.subr.bf16.mxu0 0
          %2484 = vmatpush1.bf16.msra.mxu0 0
          %2485 = vmatprep.subr.bf16.mxu0 0
          %2486 = vmatpush1.bf16.msra.mxu0 0
          %2487 = vmatprep.mubr.bf16.mxu0 0
          %2488 = vmatmul.mubr.bf16.gmra.mrb[0].mxu0 %v2358
          %v2489 = vpop.f32.mrb[0].mxu0
          %v2490 = vadd.f32 0.0, %v2489
          %v2491 = vpop.f32.mrb[0].mxu0
          %v2492 = vadd.f32 0.0, %v2491
          %v2493 = vpop.f32.mrb[0].mxu0
          %v2494 = vadd.f32 0.0, %v2493
          %v2495 = vpop.f32.mrb[0].mxu0
          %v2496 = vadd.f32 0.0, %v2495
          %2497 = vdwg.mxu0
          %2498 = vst [vmem:[#allocation9] sm:$0xff] %v2490
          %2499 = vst [vmem:[#allocation9 + $0x8] sm:$0xff] %v2492
          %2500 = vst [vmem:[#allocation9 + $0x10] sm:$0xff] %v2494
          %2501 = vst [vmem:[#allocation9 + $0x18] sm:$0xff] %v2496
        $region88: #{llama_forward.1} parent=67 // pred_fallthru
          _
        %p2502 = scmp.lt.s32.totalorder %s33, 1
        %s2503 = scalar_select %p2502, %s33, 1
        %s2504 = smul.addr %s2503, 8
        %s2505 = smul.addr %s2504, 8
        %s2506 = scalar_lea.vmem %s13, %s2505
        %p2507 = scmp.lt.s32.totalorder %s33, 1
        %s2508 = scalar_select %p2507, %s33, 1
        %s2509 = smul.addr %s2508, 2
        %s2510 = smul.addr %s2509, 8
        %s2511 = scalar_lea.vmem %s14, %s2510
        // Predicated region
        $region89: #{llama_forward.1} parent=67 // pred_check
          %p2512 = pneg %p328
        $region90: #{llama_forward.1} parent=67 // pred_check_branch
          %2514 = sbr.rel (%p2512) target = $region92
        $region91: #{llama_forward.1} parent=67 // pred_region
          %s2516 = ssub.s32 512, 512
          %2517 = vsyncadd [#allocation5], %s2516
          %s2518 = sshll.u32 [#allocation9], 4
          %s2519 = int_to_ptr.vmem [resolvable:$true] %s2518
          %2524 = dma.vmem_to_hbm [thread:$0]  %s2519, 512, %s12, [#allocation5], 256, 256, 16
        $region92: #{llama_forward.1} parent=67 // pred_fallthru
          _
        // Predicated region
        $region93: #{llama_forward.1} parent=67 // pred_check
          %p2525 = pneg %p354
        $region94: #{llama_forward.1} parent=67 // pred_check_branch
          %2527 = sbr.rel (%p2525) target = $region96
        $region95: #{llama_forward.1} parent=67 // pred_region
          _
        $region96: #{llama_forward.1} parent=67 // pred_fallthru
          _
        // Predicated region
        $region97: #{llama_forward.1} parent=67 // pred_check
          %p2528 = pneg %p380
        $region98: #{llama_forward.1} parent=67 // pred_check_branch
          %2530 = sbr.rel (%p2528) target = $region100
        $region99: #{llama_forward.1} parent=67 // pred_region
          _
        $region100: #{llama_forward.1} parent=67 // pred_fallthru
          _
        // Predicated region
        $region101: #{llama_forward.1} parent=67 // pred_check
          %p2531 = pneg %p328
        $region102: #{llama_forward.1} parent=67 // pred_check_branch
          %2533 = sbr.rel (%p2531) target = $region104
        $region103: #{llama_forward.1} parent=67 // pred_region
          %2534 = dma.done [#allocation5], 512
        $region104: #{llama_forward.1} parent=67 // pred_fallthru
          _
      $region68: #{llama_forward.1} parent=5 // pred_fallthru
        _
      %p2535 = scmp.le.s32.totalorder 2, %s28
      // Predicated region
      $region105: #{llama_forward.1} parent=5 // pred_check
        %p2536 = pneg %p2535
      $region106: #{llama_forward.1} parent=5 // pred_check_branch
        %2538 = sbr.rel (%p2536) target = $region108
      $region107: #{llama_forward.1} parent=5 // pred_region
        %s2539 = ssub.s32 %s28, 2
        // Predicated region
        $region109: #{llama_forward.1} parent=107 // pred_check
          %p2540 = pneg %p360
        $region110: #{llama_forward.1} parent=107 // pred_check_branch
          %2542 = sbr.rel (%p2540) target = $region112
        $region111: #{llama_forward.1} parent=107 // pred_region
          %p2543 = scmp.lt.s32.totalorder %s34, 1
          %s2544 = scalar_select %p2543, %s34, 1
          %s2545 = smul.addr %s2544, 8
          %s2546 = smul.addr %s2545, 8
          %s2547 = scalar_lea.vmem %s13, %s2546
        $region112: #{llama_forward.1} parent=107 // pred_fallthru
          _
        // Predicated region
        $region113: #{llama_forward.1} parent=107 // pred_check
          %p2548 = pneg %p386
        $region114: #{llama_forward.1} parent=107 // pred_check_branch
          %2550 = sbr.rel (%p2548) target = $region116
        $region115: #{llama_forward.1} parent=107 // pred_region
          %p2551 = scmp.lt.s32.totalorder %s34, 1
          %s2552 = scalar_select %p2551, %s34, 1
          %s2553 = smul.addr %s2552, 2
          %s2554 = smul.addr %s2553, 8
          %s2555 = scalar_lea.vmem %s14, %s2554
        $region116: #{llama_forward.1} parent=107 // pred_fallthru
          _
      $region108: #{llama_forward.1} parent=5 // pred_fallthru
        _
    $region6: #{llama_forward.1} parent=1 // loop_footer
      %s32 = sadd.s32 1, %s28
    $region7: #{llama_forward.1} parent=1 // loop_footer_branch
      %27 = sbr.rel target = $region3
    $region8: #{llama_forward.1} parent=1 // loop_exit
      _
    %2556 = vsyncpa [#allocation4], 1
    %s2557 = scalar_lea.sflag [#allocation4], 1
    %2558 = vsyncpa %s2557, 1
    %2559 = vsyncpa [#allocation7], 1
    %s2560 = scalar_lea.sflag [#allocation7], 1
    %2561 = vsyncpa %s2560, 1
    %2562 = vsyncpa [#allocation5], 1
    %s2563 = scalar_lea.sflag [#allocation5], 1
    %2564 = vsyncpa %s2563, 1

</llo_original>
